<compile_context>
chip_gen: v6e
topology: v6e:2x2x1
jax: 0.10.0
libtpu: 0.0.40
codegen_flags: <defaults>
</compile_context>

<pallas_src>
import jax
import jax.numpy as jnp
from jax.experimental import pallas as pl
from jax.experimental.pallas import tpu as pltpu

NUM_NODES = 50   # LSTMCell "batch" axis == conv channel axis
T_IN = 12        # LSTMCell input size
HID = 6          # LSTMCell hidden size == conv spatial H
C1 = 100         # f_conv / f_conv2 output channels (50 * 2)
LANES = 128      # node / channel axes zero-padded to one full lane tile
GB = 8           # padded gate block size / padded H (one sublane tile)


def dpm_kernel(x_ref, w_ih_ref, w_hh_ref, b_lstm_ref,
               w_conv_hbm, b_conv_ref, wl_blk_ref, bl_ref, mask_ref,
               out_ref,
               al_ref, wconv_vmem, dma_sem):
    BH = al_ref.shape[0]
    B = BH // GB

    # ---- Kick off conv-weight DMA (HBM -> VMEM); hidden behind the LSTM ----
    wdma = pltpu.make_async_copy(w_conv_hbm, wconv_vmem, dma_sem)
    wdma.start()

    # ---- Phase 1: hoisted input projection for all timesteps (one matmul) --
    # (32,12) @ (12, B*128) -> (32, B*128); lane block t holds timestep t.
    gflat = (jnp.dot(w_ih_ref[...], x_ref[...],
                     preferred_element_type=jnp.float32)
             + b_lstm_ref[...])

    # ---- Phase 2: serial LSTM recurrence; h/c carried in vregs -------------
    w_hh = w_hh_ref[...]                                          # (32, 8)
    h = jnp.zeros((GB, LANES), jnp.float32)
    c = jnp.zeros((GB, LANES), jnp.float32)
    # TODO(synk): for large B, cap the unroll and stage gflat through VMEM
    # scratch instead of keeping all B lane-blocks resident in vregs.
    for t in range(B):                    # static, fully unrolled
        gates = gflat[:, t * LANES:(t + 1) * LANES] + jnp.dot(
            w_hh, h, preferred_element_type=jnp.float32)          # (32, 128)
        s = jax.nn.sigmoid(gates)         # one EUP pass; g rows pre-scaled x2
        i_g = s[0 * GB:1 * GB, :]
        f_g = s[1 * GB:2 * GB, :]
        g_g = 2.0 * s[2 * GB:3 * GB, :] - 1.0   # == tanh of the raw g gate
        o_g = s[3 * GB:4 * GB, :]
        c = f_g * c + i_g * g_g
        h = jnp.tanh(o_g * jnp.tanh(c))   # extra tanh from forward()
        al_ref[t * GB:(t + 1) * GB, :] = h      # rows 6,7 stay exactly 0

    # ---- Phase 3: batched 1-D convs along H, one K=384 matmul per layer ----
    wdma.wait()
    keep = mask_ref[...]                  # (B*8,1): 1 on data rows, 0 on pads
    b_all = b_conv_ref[...]               # (3, 128)

    def conv_layer(x, w, b):
        # out[r] = x[r-1]@w_k0 + x[r]@w_k1 + x[r+1]@w_k2; the zero pad rows
        # (6,7 of each 8-row block) supply the conv's zero padding, including
        # across the roll wrap-around at the slab ends.
        xs = jnp.concatenate(
            [jnp.roll(x, 1, axis=0), x, jnp.roll(x, -1, axis=0)], axis=1)
        z = jnp.dot(xs, w, preferred_element_type=jnp.float32) + b
        return jax.nn.relu(z)

    # TODO(synk): for large B, process the conv slab in <=64-row chunks (and
    # on v7x grid the conv/lean phase over B on the second TensorCore).
    f1 = conv_layer(al_ref[...], wconv_vmem[0], b_all[0:1, :]) * keep
    f2 = conv_layer(f1, wconv_vmem[1], b_all[1:2, :]) * keep
    f3 = conv_layer(f2, wconv_vmem[2], b_all[2:3, :])
    # f3 pad rows are non-zero; they are killed by wl_blk's zero columns.

    # ---- Phase 4: one block-diagonal lean matmul + one bulk store ----------
    out_ref[...] = (jnp.dot(wl_blk_ref[...], f3,
                            preferred_element_type=jnp.float32) + bl_ref[...])


def _pad_gate_rows(w):
    """(4*HID, k) or (4*HID,) -> (4*GB, k): zero rows 6,7 inside each gate
    block; the g-gate block is pre-scaled by 2 for the fused-sigmoid trick
    (tanh(z) == 2*sigmoid(2z) - 1)."""
    w3 = w.astype(jnp.float32).reshape(4, HID, -1)
    w3 = w3.at[2].multiply(2.0)
    w3 = jnp.pad(w3, ((0, 0), (0, GB - HID), (0, 0)))
    return w3.reshape(4 * GB, -1)


def _conv_w_stacked(w):
    """torch (Cout, Cin, 3, 3) -> stacked (3*128, 128); only kw==1 is live
    (input W == 1 with padding (1,1)). Row block kh pairs with x[r-1+kh]."""
    wk = jnp.transpose(w[:, :, :, 1], (2, 1, 0)).astype(jnp.float32)  # (3,Cin,Cout)
    out = jnp.zeros((3, LANES, LANES), jnp.float32)
    out = out.at[:, :wk.shape[1], :wk.shape[2]].set(wk)
    return out.reshape(3 * LANES, LANES)


def _pad_lanes(b):
    out = jnp.zeros((LANES,), jnp.float32)
    return out.at[:b.shape[0]].set(b.astype(jnp.float32))


def init_params(key):
    def u(k, shape, fan_in):
        bound = 1.0 / (fan_in ** 0.5)
        return jax.random.uniform(k, shape, jnp.float32, -bound, bound)

    ks = jax.random.split(key, 12)
    return dict(
        w_ih=u(ks[0], (4 * HID, T_IN), HID),        # LSTMCell weight_ih
        w_hh=u(ks[1], (4 * HID, HID), HID),         # LSTMCell weight_hh
        b_ih=u(ks[2], (4 * HID,), HID),
        b_hh=u(ks[3], (4 * HID,), HID),
        w1=u(ks[4], (C1, NUM_NODES, 3, 3), NUM_NODES * 9),   # f_conv
        b1=u(ks[5], (C1,), NUM_NODES * 9),
        w2=u(ks[6], (C1, C1, 3, 3), C1 * 9),                 # f_conv2
        b2=u(ks[7], (C1,), C1 * 9),
        w3=u(ks[8], (NUM_NODES, C1, 3, 3), C1 * 9),          # f_conv3
        b3=u(ks[9], (NUM_NODES,), C1 * 9),
        wlean=u(ks[10], (HID, HID), HID),                    # lean Linear(6,6)
        blean=u(ks[11], (HID,), HID),
    )


@jax.jit
def dpm_forward(A_hat, X, params):
    del A_hat  # unused by the reference forward()
    B = X.shape[0]

    # torch: squeeze(X, 4).reshape(-1, 50, 12); nodes -> lanes, zero-pad to 128.
    x = X.reshape(B, NUM_NODES, T_IN).astype(jnp.float32)
    xT = jnp.transpose(x, (2, 0, 1))                              # (12, B, 50)
    xp = jnp.zeros((T_IN, B, LANES), jnp.float32).at[:, :, :NUM_NODES].set(xT)
    x_flat = xp.reshape(T_IN, B * LANES)                          # (12, B*128)

    # LSTM weights, gate blocks padded 6 -> 8 rows; g block pre-scaled by 2.
    w_ih_p = _pad_gate_rows(params['w_ih'])                       # (32, 12)
    w_hh_p = jnp.pad(_pad_gate_rows(params['w_hh']),
                     ((0, 0), (0, GB - HID)))                     # (32, 8)
    b_lstm_p = _pad_gate_rows(params['b_ih'] + params['b_hh'])    # (32, 1)

    # Conv weights stacked for the K=384 fused matmul; packed for one DMA.
    w_conv = jnp.stack([_conv_w_stacked(params['w1']),
                        _conv_w_stacked(params['w2']),
                        _conv_w_stacked(params['w3'])], axis=0)   # (3, 384, 128)
    b_conv = jnp.stack([_pad_lanes(params['b1']),
                        _pad_lanes(params['b2']),
                        _pad_lanes(params['b3'])], axis=0)        # (3, 128)

    # lean Linear(6,6) padded to (8,8); block-diagonal over B for one matmul.
    # Zero cols of wl_p kill f3's non-zero pad rows (correctness invariant).
    wl_p = jnp.zeros((GB, GB), jnp.float32).at[:HID, :HID].set(params['wlean'])
    # TODO(synk): kron(I_B, wl) grows O(B^2); tile Phase 4 for very large B.
    wl_blk = jnp.kron(jnp.eye(B, dtype=jnp.float32), wl_p)        # (B*8, B*8)
    bl_p = jnp.zeros((GB, 1), jnp.float32).at[:HID, 0].set(params['blean'])
    bl_tiled = jnp.tile(bl_p, (B, 1))                             # (B*8, 1)

    # Pad-row mask for the flattened (B*8, 128) conv slab.
    row_mask = (jnp.tile(jnp.arange(GB) < HID, B)
                .astype(jnp.float32).reshape(B * GB, 1))

    vmem = pl.BlockSpec(memory_space=pltpu.MemorySpace.VMEM)
    hbm = pl.BlockSpec(memory_space=pl.ANY)   # conv weights: manual DMA overlap

    # TODO(synk): set pltpu.CompilerParams(vmem_limit_bytes=...) and tile B
    # with a grid once B*~30 KiB of scratch approaches the scoped VMEM limit.
    out_fm = pl.pallas_call(
        dpm_kernel,
        out_shape=jax.ShapeDtypeStruct((B * GB, LANES), jnp.float32),
        in_specs=[vmem, vmem, vmem, vmem, hbm, vmem, vmem, vmem, vmem],
        out_specs=vmem,
        scratch_shapes=[
            pltpu.VMEM((B * GB, LANES), jnp.float32),        # al (conv slab)
            pltpu.VMEM((3, 3 * LANES, LANES), jnp.float32),  # conv weights
            pltpu.SemaphoreType.DMA(()),                     # weight-DMA sem
        ],
    )(x_flat, w_ih_p, w_hh_p, b_lstm_p,
      w_conv, b_conv, wl_blk, bl_tiled, row_mask)

    # lane-dense (B*8, 128) -> torch layout (B, 50, 6, 1): pure layout glue.
    out = out_fm.reshape(B, GB, LANES)[:, :HID, :NUM_NODES]       # (B, 6, 50)
    return jnp.transpose(out, (0, 2, 1))[..., None]


def dpm_reference(A_hat, X, params):
    """Pure-JAX mirror of the PyTorch forward (for validation)."""
    del A_hat
    B = X.shape[0]
    hp = jax.lax.Precision.HIGHEST
    out1 = X.reshape(B, NUM_NODES, T_IN).astype(jnp.float32)
    h = jnp.zeros((NUM_NODES, HID), jnp.float32)
    c = jnp.zeros((NUM_NODES, HID), jnp.float32)
    al = []
    for i in range(B):
        g = (jnp.dot(out1[i], params['w_ih'].T, precision=hp) + params['b_ih']
             + jnp.dot(h, params['w_hh'].T, precision=hp) + params['b_hh'])
        i_g = jax.nn.sigmoid(g[:, 0:HID])
        f_g = jax.nn.sigmoid(g[:, HID:2 * HID])
        g_g = jnp.tanh(g[:, 2 * HID:3 * HID])
        o_g = jax.nn.sigmoid(g[:, 3 * HID:4 * HID])
        c = f_g * c + i_g * g_g
        h = jnp.tanh(o_g * jnp.tanh(c))
        al.append(h[:, :, None])
    al = jnp.transpose(jnp.concatenate(al, axis=-1), (2, 0, 1))   # (B, 50, 6)
    out2 = al.reshape(B, NUM_NODES, HID, 1)

    def conv(x, w, b):
        y = jax.lax.conv_general_dilated(
            x, w, (1, 1), ((1, 1), (1, 1)),
            dimension_numbers=('NCHW', 'OIHW', 'NCHW'), precision=hp)
        return y + b[None, :, None, None]

    f = jax.nn.relu(conv(out2, params['w1'], params['b1']))
    f = jax.nn.relu(conv(f, params['w2'], params['b2']))
    f = jax.nn.relu(conv(f, params['w3'], params['b3']))
    y = jnp.dot(f.reshape(-1, HID), params['wlean'].T, precision=hp) + params['blean']
    return y.reshape(B, NUM_NODES, HID, 1)


if __name__ == "__main__":
    key = jax.random.PRNGKey(0)
    pk, xk, ak = jax.random.split(key, 3)
    params = init_params(pk)

    B = 4
    X = jax.random.normal(xk, (B, NUM_NODES, T_IN, 1, 1), jnp.float32)
    A_hat = jax.random.normal(ak, (NUM_NODES, NUM_NODES), jnp.float32)

    out = dpm_forward(A_hat, X, params)
    out = jax.block_until_ready(out)
    assert out.shape == (B, NUM_NODES, HID, 1), out.shape

    ref = dpm_reference(A_hat, X, params)
    max_err = float(jnp.max(jnp.abs(out - ref)))
    if not max_err < 1e-3:
        raise AssertionError(f"kernel/reference mismatch: max abs err = {max_err}")

    print("KERNEL_OK")
</pallas_src>

<mosaic_0001>
module attributes {stable_mosaic.version = 11 : i64} {
  func.func @dpm_kernel(%arg0: memref<12x512xf32, #tpu.memory_space<vmem>>, %arg1: memref<32x12xf32, #tpu.memory_space<vmem>>, %arg2: memref<32x8xf32, #tpu.memory_space<vmem>>, %arg3: memref<32x1xf32, #tpu.memory_space<vmem>>, %arg4: memref<3x384x128xf32, #tpu.memory_space<any>>, %arg5: memref<3x128xf32, #tpu.memory_space<vmem>>, %arg6: memref<32x32xf32, #tpu.memory_space<vmem>>, %arg7: memref<32x1xf32, #tpu.memory_space<vmem>>, %arg8: memref<32x1xf32, #tpu.memory_space<vmem>>, %arg9: memref<32x128xf32, #tpu.memory_space<vmem>>, %arg10: memref<32x128xf32, #tpu.memory_space<vmem>>, %arg11: memref<3x384x128xf32, #tpu.memory_space<vmem>>, %arg12: memref<!tpu.dma_semaphore, #tpu.memory_space<semaphore_mem>>) attributes {dimension_semantics = [], scalar_prefetch = 0 : i64, scratch_operands = 3 : i64, tpu.core_type = #tpu.core_type<tc>} {
    tpu.enqueue_dma source(%arg4 : memref<3x384x128xf32, #tpu.memory_space<any>>) target(%arg11 : memref<3x384x128xf32, #tpu.memory_space<vmem>>) target_semaphore(%arg12 : memref<!tpu.dma_semaphore, #tpu.memory_space<semaphore_mem>>)
    %c0 = arith.constant 0 : index
    %c0_0 = arith.constant 0 : index
    %0 = vector.load %arg1[%c0, %c0_0] : memref<32x12xf32, #tpu.memory_space<vmem>>, vector<32x12xf32>
    %c0_1 = arith.constant 0 : index
    %c0_2 = arith.constant 0 : index
    %1 = vector.load %arg0[%c0_1, %c0_2] : memref<12x512xf32, #tpu.memory_space<vmem>>, vector<12x512xf32>
    %cst = arith.constant dense<0.000000e+00> : vector<32x512xf32>
    %2 = tpu.matmul %0, %1, %cst {dimension_numbers = #tpu.dot_dimension_numbers<[1], [0], [0], [1], [0, 0, 1, 1], [], []>} : vector<32x12xf32>, vector<12x512xf32>, vector<32x512xf32> -> vector<32x512xf32>
    %c0_3 = arith.constant 0 : index
    %c0_4 = arith.constant 0 : index
    %3 = vector.load %arg3[%c0_3, %c0_4] : memref<32x1xf32, #tpu.memory_space<vmem>>, vector<32x1xf32>
    %4 = vector.broadcast %3 : vector<32x1xf32> to vector<32x512xf32>
    %5 = arith.addf %2, %4 : vector<32x512xf32>
    %c0_5 = arith.constant 0 : index
    %c0_6 = arith.constant 0 : index
    %6 = vector.load %arg2[%c0_5, %c0_6] : memref<32x8xf32, #tpu.memory_space<vmem>>, vector<32x8xf32>
    %cst_7 = arith.constant 0.000000e+00 : f32
    %7 = vector.broadcast %cst_7 : f32 to vector<8x128xf32>
    %cst_8 = arith.constant 0.000000e+00 : f32
    %8 = vector.broadcast %cst_8 : f32 to vector<8x128xf32>
    %9 = vector.extract_strided_slice %5 {offsets = [0, 0], sizes = [32, 128], strides = [1, 1]} : vector<32x512xf32> to vector<32x128xf32>
    %cst_9 = arith.constant dense<0.000000e+00> : vector<32x128xf32>
    %10 = tpu.matmul %6, %7, %cst_9 {dimension_numbers = #tpu.dot_dimension_numbers<[1], [0], [0], [1], [0, 0, 1, 1], [], []>} : vector<32x8xf32>, vector<8x128xf32>, vector<32x128xf32> -> vector<32x128xf32>
    %11 = arith.addf %9, %10 : vector<32x128xf32>
    %12 = arith.negf %11 : vector<32x128xf32>
    %13 = math.exp %12 : vector<32x128xf32>
    %cst_10 = arith.constant 1.000000e+00 : f32
    %14 = vector.broadcast %cst_10 : f32 to vector<32x128xf32>
    %15 = arith.addf %14, %13 : vector<32x128xf32>
    %16 = arith.divf %14, %15 : vector<32x128xf32>
    %17 = vector.extract_strided_slice %16 {offsets = [0, 0], sizes = [8, 128], strides = [1, 1]} : vector<32x128xf32> to vector<8x128xf32>
    %18 = vector.extract_strided_slice %16 {offsets = [8, 0], sizes = [8, 128], strides = [1, 1]} : vector<32x128xf32> to vector<8x128xf32>
    %19 = vector.extract_strided_slice %16 {offsets = [16, 0], sizes = [8, 128], strides = [1, 1]} : vector<32x128xf32> to vector<8x128xf32>
    %cst_11 = arith.constant 2.000000e+00 : f32
    %20 = vector.broadcast %cst_11 : f32 to vector<8x128xf32>
    %21 = arith.mulf %20, %19 : vector<8x128xf32>
    %cst_12 = arith.constant 1.000000e+00 : f32
    %22 = vector.broadcast %cst_12 : f32 to vector<8x128xf32>
    %23 = arith.subf %21, %22 : vector<8x128xf32>
    %24 = vector.extract_strided_slice %16 {offsets = [24, 0], sizes = [8, 128], strides = [1, 1]} : vector<32x128xf32> to vector<8x128xf32>
    %25 = arith.mulf %18, %8 : vector<8x128xf32>
    %26 = arith.mulf %17, %23 : vector<8x128xf32>
    %27 = arith.addf %25, %26 : vector<8x128xf32>
    %28 = math.tanh %27 : vector<8x128xf32>
    %29 = arith.mulf %24, %28 : vector<8x128xf32>
    %30 = math.tanh %29 : vector<8x128xf32>
    %c0_13 = arith.constant 0 : index
    %c0_14 = arith.constant 0 : index
    %31 = vector.load %arg10[%c0_13, %c0_14] : memref<32x128xf32, #tpu.memory_space<vmem>>, vector<8x128xf32>
    tpu.vector_store %arg10[%c0_13, %c0_14], %30 {strides = array<i32>} : memref<32x128xf32, #tpu.memory_space<vmem>>, vector<8x128xf32>,
    %32 = vector.extract_strided_slice %5 {offsets = [0, 128], sizes = [32, 128], strides = [1, 1]} : vector<32x512xf32> to vector<32x128xf32>
    %cst_15 = arith.constant dense<0.000000e+00> : vector<32x128xf32>
    %33 = tpu.matmul %6, %30, %cst_15 {dimension_numbers = #tpu.dot_dimension_numbers<[1], [0], [0], [1], [0, 0, 1, 1], [], []>} : vector<32x8xf32>, vector<8x128xf32>, vector<32x128xf32> -> vector<32x128xf32>
    %34 = arith.addf %32, %33 : vector<32x128xf32>
    %35 = arith.negf %34 : vector<32x128xf32>
    %36 = math.exp %35 : vector<32x128xf32>
    %cst_16 = arith.constant 1.000000e+00 : f32
    %37 = vector.broadcast %cst_16 : f32 to vector<32x128xf32>
    %38 = arith.addf %37, %36 : vector<32x128xf32>
    %39 = arith.divf %37, %38 : vector<32x128xf32>
    %40 = vector.extract_strided_slice %39 {offsets = [0, 0], sizes = [8, 128], strides = [1, 1]} : vector<32x128xf32> to vector<8x128xf32>
    %41 = vector.extract_strided_slice %39 {offsets = [8, 0], sizes = [8, 128], strides = [1, 1]} : vector<32x128xf32> to vector<8x128xf32>
    %42 = vector.extract_strided_slice %39 {offsets = [16, 0], sizes = [8, 128], strides = [1, 1]} : vector<32x128xf32> to vector<8x128xf32>
    %cst_17 = arith.constant 2.000000e+00 : f32
    %43 = vector.broadcast %cst_17 : f32 to vector<8x128xf32>
    %44 = arith.mulf %43, %42 : vector<8x128xf32>
    %cst_18 = arith.constant 1.000000e+00 : f32
    %45 = vector.broadcast %cst_18 : f32 to vector<8x128xf32>
    %46 = arith.subf %44, %45 : vector<8x128xf32>
    %47 = vector.extract_strided_slice %39 {offsets = [24, 0], sizes = [8, 128], strides = [1, 1]} : vector<32x128xf32> to vector<8x128xf32>
    %48 = arith.mulf %41, %27 : vector<8x128xf32>
    %49 = arith.mulf %40, %46 : vector<8x128xf32>
    %50 = arith.addf %48, %49 : vector<8x128xf32>
    %51 = math.tanh %50 : vector<8x128xf32>
    %52 = arith.mulf %47, %51 : vector<8x128xf32>
    %53 = math.tanh %52 : vector<8x128xf32>
    %c8 = arith.constant 8 : index
    %c0_19 = arith.constant 0 : index
    %54 = vector.load %arg10[%c8, %c0_19] : memref<32x128xf32, #tpu.memory_space<vmem>>, vector<8x128xf32>
    tpu.vector_store %arg10[%c8, %c0_19], %53 {strides = array<i32>} : memref<32x128xf32, #tpu.memory_space<vmem>>, vector<8x128xf32>,
    %55 = vector.extract_strided_slice %5 {offsets = [0, 256], sizes = [32, 128], strides = [1, 1]} : vector<32x512xf32> to vector<32x128xf32>
    %cst_20 = arith.constant dense<0.000000e+00> : vector<32x128xf32>
    %56 = tpu.matmul %6, %53, %cst_20 {dimension_numbers = #tpu.dot_dimension_numbers<[1], [0], [0], [1], [0, 0, 1, 1], [], []>} : vector<32x8xf32>, vector<8x128xf32>, vector<32x128xf32> -> vector<32x128xf32>
    %57 = arith.addf %55, %56 : vector<32x128xf32>
    %58 = arith.negf %57 : vector<32x128xf32>
    %59 = math.exp %58 : vector<32x128xf32>
    %cst_21 = arith.constant 1.000000e+00 : f32
    %60 = vector.broadcast %cst_21 : f32 to vector<32x128xf32>
    %61 = arith.addf %60, %59 : vector<32x128xf32>
    %62 = arith.divf %60, %61 : vector<32x128xf32>
    %63 = vector.extract_strided_slice %62 {offsets = [0, 0], sizes = [8, 128], strides = [1, 1]} : vector<32x128xf32> to vector<8x128xf32>
    %64 = vector.extract_strided_slice %62 {offsets = [8, 0], sizes = [8, 128], strides = [1, 1]} : vector<32x128xf32> to vector<8x128xf32>
    %65 = vector.extract_strided_slice %62 {offsets = [16, 0], sizes = [8, 128], strides = [1, 1]} : vector<32x128xf32> to vector<8x128xf32>
    %cst_22 = arith.constant 2.000000e+00 : f32
    %66 = vector.broadcast %cst_22 : f32 to vector<8x128xf32>
    %67 = arith.mulf %66, %65 : vector<8x128xf32>
    %cst_23 = arith.constant 1.000000e+00 : f32
    %68 = vector.broadcast %cst_23 : f32 to vector<8x128xf32>
    %69 = arith.subf %67, %68 : vector<8x128xf32>
    %70 = vector.extract_strided_slice %62 {offsets = [24, 0], sizes = [8, 128], strides = [1, 1]} : vector<32x128xf32> to vector<8x128xf32>
    %71 = arith.mulf %64, %50 : vector<8x128xf32>
    %72 = arith.mulf %63, %69 : vector<8x128xf32>
    %73 = arith.addf %71, %72 : vector<8x128xf32>
    %74 = math.tanh %73 : vector<8x128xf32>
    %75 = arith.mulf %70, %74 : vector<8x128xf32>
    %76 = math.tanh %75 : vector<8x128xf32>
    %c16 = arith.constant 16 : index
    %c0_24 = arith.constant 0 : index
    %77 = vector.load %arg10[%c16, %c0_24] : memref<32x128xf32, #tpu.memory_space<vmem>>, vector<8x128xf32>
    tpu.vector_store %arg10[%c16, %c0_24], %76 {strides = array<i32>} : memref<32x128xf32, #tpu.memory_space<vmem>>, vector<8x128xf32>,
    %78 = vector.extract_strided_slice %5 {offsets = [0, 384], sizes = [32, 128], strides = [1, 1]} : vector<32x512xf32> to vector<32x128xf32>
    %cst_25 = arith.constant dense<0.000000e+00> : vector<32x128xf32>
    %79 = tpu.matmul %6, %76, %cst_25 {dimension_numbers = #tpu.dot_dimension_numbers<[1], [0], [0], [1], [0, 0, 1, 1], [], []>} : vector<32x8xf32>, vector<8x128xf32>, vector<32x128xf32> -> vector<32x128xf32>
    %80 = arith.addf %78, %79 : vector<32x128xf32>
    %81 = arith.negf %80 : vector<32x128xf32>
    %82 = math.exp %81 : vector<32x128xf32>
    %cst_26 = arith.constant 1.000000e+00 : f32
    %83 = vector.broadcast %cst_26 : f32 to vector<32x128xf32>
    %84 = arith.addf %83, %82 : vector<32x128xf32>
    %85 = arith.divf %83, %84 : vector<32x128xf32>
    %86 = vector.extract_strided_slice %85 {offsets = [0, 0], sizes = [8, 128], strides = [1, 1]} : vector<32x128xf32> to vector<8x128xf32>
    %87 = vector.extract_strided_slice %85 {offsets = [8, 0], sizes = [8, 128], strides = [1, 1]} : vector<32x128xf32> to vector<8x128xf32>
    %88 = vector.extract_strided_slice %85 {offsets = [16, 0], sizes = [8, 128], strides = [1, 1]} : vector<32x128xf32> to vector<8x128xf32>
    %cst_27 = arith.constant 2.000000e+00 : f32
    %89 = vector.broadcast %cst_27 : f32 to vector<8x128xf32>
    %90 = arith.mulf %89, %88 : vector<8x128xf32>
    %cst_28 = arith.constant 1.000000e+00 : f32
    %91 = vector.broadcast %cst_28 : f32 to vector<8x128xf32>
    %92 = arith.subf %90, %91 : vector<8x128xf32>
    %93 = vector.extract_strided_slice %85 {offsets = [24, 0], sizes = [8, 128], strides = [1, 1]} : vector<32x128xf32> to vector<8x128xf32>
    %94 = arith.mulf %87, %73 : vector<8x128xf32>
    %95 = arith.mulf %86, %92 : vector<8x128xf32>
    %96 = arith.addf %94, %95 : vector<8x128xf32>
    %97 = math.tanh %96 : vector<8x128xf32>
    %98 = arith.mulf %93, %97 : vector<8x128xf32>
    %99 = math.tanh %98 : vector<8x128xf32>
    %c24 = arith.constant 24 : index
    %c0_29 = arith.constant 0 : index
    %100 = vector.load %arg10[%c24, %c0_29] : memref<32x128xf32, #tpu.memory_space<vmem>>, vector<8x128xf32>
    tpu.vector_store %arg10[%c24, %c0_29], %99 {strides = array<i32>} : memref<32x128xf32, #tpu.memory_space<vmem>>, vector<8x128xf32>,
    tpu.wait_dma2 semaphore(%arg12 : memref<!tpu.dma_semaphore, #tpu.memory_space<semaphore_mem>>) src(%arg4 : memref<3x384x128xf32, #tpu.memory_space<any>>) dst(%arg11 : memref<3x384x128xf32, #tpu.memory_space<vmem>>)
    %c0_30 = arith.constant 0 : index
    %c0_31 = arith.constant 0 : index
    %101 = vector.load %arg8[%c0_30, %c0_31] : memref<32x1xf32, #tpu.memory_space<vmem>>, vector<32x1xf32>
    %c0_32 = arith.constant 0 : index
    %c0_33 = arith.constant 0 : index
    %102 = vector.load %arg5[%c0_32, %c0_33] : memref<3x128xf32, #tpu.memory_space<vmem>>, vector<3x128xf32>
    %c0_34 = arith.constant 0 : index
    %c0_35 = arith.constant 0 : index
    %103 = vector.load %arg10[%c0_34, %c0_35] : memref<32x128xf32, #tpu.memory_space<vmem>>, vector<32x128xf32>
    %c0_36 = arith.constant 0 : index
    %c0_37 = arith.constant 0 : index
    %c0_38 = arith.constant 0 : index
    %104 = vector.load %arg11[%c0_36, %c0_37, %c0_38] : memref<3x384x128xf32, #tpu.memory_space<vmem>>, vector<1x384x128xf32>
    %105 = vector.shape_cast %104 : vector<1x384x128xf32> to vector<384x128xf32>
    %106 = vector.extract_strided_slice %102 {offsets = [0, 0], sizes = [1, 128], strides = [1, 1]} : vector<3x128xf32> to vector<1x128xf32>
    %107 = vector.extract_strided_slice %103 {offsets = [31, 0], sizes = [1, 128], strides = [1, 1]} : vector<32x128xf32> to vector<1x128xf32>
    %108 = vector.extract_strided_slice %103 {offsets = [0, 0], sizes = [31, 128], strides = [1, 1]} : vector<32x128xf32> to vector<31x128xf32>
    %109 = tpu.concatenate %107, %108 in 0 : vector<1x128xf32>, vector<31x128xf32> -> vector<32x128xf32>
    %110 = vector.extract_strided_slice %103 {offsets = [1, 0], sizes = [31, 128], strides = [1, 1]} : vector<32x128xf32> to vector<31x128xf32>
    %111 = vector.extract_strided_slice %103 {offsets = [0, 0], sizes = [1, 128], strides = [1, 1]} : vector<32x128xf32> to vector<1x128xf32>
    %112 = tpu.concatenate %110, %111 in 0 : vector<31x128xf32>, vector<1x128xf32> -> vector<32x128xf32>
    %113 = tpu.concatenate %109, %103, %112 in 1 : vector<32x128xf32>, vector<32x128xf32>, vector<32x128xf32> -> vector<32x384xf32>
    %cst_39 = arith.constant dense<0.000000e+00> : vector<32x128xf32>
    %114 = tpu.matmul %113, %105, %cst_39 {dimension_numbers = #tpu.dot_dimension_numbers<[1], [0], [0], [1], [0, 0, 1, 1], [], []>} : vector<32x384xf32>, vector<384x128xf32>, vector<32x128xf32> -> vector<32x128xf32>
    %115 = vector.broadcast %106 : vector<1x128xf32> to vector<32x128xf32>
    %116 = arith.addf %114, %115 : vector<32x128xf32>
    %cst_40 = arith.constant 0.000000e+00 : f32
    %117 = vector.broadcast %cst_40 : f32 to vector<32x128xf32>
    %118 = arith.maximumf %116, %117 : vector<32x128xf32>
    %119 = vector.broadcast %101 : vector<32x1xf32> to vector<32x128xf32>
    %120 = arith.mulf %118, %119 : vector<32x128xf32>
    %c1 = arith.constant 1 : index
    %c0_41 = arith.constant 0 : index
    %c0_42 = arith.constant 0 : index
    %121 = vector.load %arg11[%c1, %c0_41, %c0_42] : memref<3x384x128xf32, #tpu.memory_space<vmem>>, vector<1x384x128xf32>
    %122 = vector.shape_cast %121 : vector<1x384x128xf32> to vector<384x128xf32>
    %123 = vector.extract_strided_slice %102 {offsets = [1, 0], sizes = [1, 128], strides = [1, 1]} : vector<3x128xf32> to vector<1x128xf32>
    %124 = vector.extract_strided_slice %120 {offsets = [31, 0], sizes = [1, 128], strides = [1, 1]} : vector<32x128xf32> to vector<1x128xf32>
    %125 = vector.extract_strided_slice %120 {offsets = [0, 0], sizes = [31, 128], strides = [1, 1]} : vector<32x128xf32> to vector<31x128xf32>
    %126 = tpu.concatenate %124, %125 in 0 : vector<1x128xf32>, vector<31x128xf32> -> vector<32x128xf32>
    %127 = vector.extract_strided_slice %120 {offsets = [1, 0], sizes = [31, 128], strides = [1, 1]} : vector<32x128xf32> to vector<31x128xf32>
    %128 = vector.extract_strided_slice %120 {offsets = [0, 0], sizes = [1, 128], strides = [1, 1]} : vector<32x128xf32> to vector<1x128xf32>
    %129 = tpu.concatenate %127, %128 in 0 : vector<31x128xf32>, vector<1x128xf32> -> vector<32x128xf32>
    %130 = tpu.concatenate %126, %120, %129 in 1 : vector<32x128xf32>, vector<32x128xf32>, vector<32x128xf32> -> vector<32x384xf32>
    %cst_43 = arith.constant dense<0.000000e+00> : vector<32x128xf32>
    %131 = tpu.matmul %130, %122, %cst_43 {dimension_numbers = #tpu.dot_dimension_numbers<[1], [0], [0], [1], [0, 0, 1, 1], [], []>} : vector<32x384xf32>, vector<384x128xf32>, vector<32x128xf32> -> vector<32x128xf32>
    %132 = vector.broadcast %123 : vector<1x128xf32> to vector<32x128xf32>
    %133 = arith.addf %131, %132 : vector<32x128xf32>
    %cst_44 = arith.constant 0.000000e+00 : f32
    %134 = vector.broadcast %cst_44 : f32 to vector<32x128xf32>
    %135 = arith.maximumf %133, %134 : vector<32x128xf32>
    %136 = vector.broadcast %101 : vector<32x1xf32> to vector<32x128xf32>
    %137 = arith.mulf %135, %136 : vector<32x128xf32>
    %c2 = arith.constant 2 : index
    %c0_45 = arith.constant 0 : index
    %c0_46 = arith.constant 0 : index
    %138 = vector.load %arg11[%c2, %c0_45, %c0_46] : memref<3x384x128xf32, #tpu.memory_space<vmem>>, vector<1x384x128xf32>
    %139 = vector.shape_cast %138 : vector<1x384x128xf32> to vector<384x128xf32>
    %140 = vector.extract_strided_slice %102 {offsets = [2, 0], sizes = [1, 128], strides = [1, 1]} : vector<3x128xf32> to vector<1x128xf32>
    %141 = vector.extract_strided_slice %137 {offsets = [31, 0], sizes = [1, 128], strides = [1, 1]} : vector<32x128xf32> to vector<1x128xf32>
    %142 = vector.extract_strided_slice %137 {offsets = [0, 0], sizes = [31, 128], strides = [1, 1]} : vector<32x128xf32> to vector<31x128xf32>
    %143 = tpu.concatenate %141, %142 in 0 : vector<1x128xf32>, vector<31x128xf32> -> vector<32x128xf32>
    %144 = vector.extract_strided_slice %137 {offsets = [1, 0], sizes = [31, 128], strides = [1, 1]} : vector<32x128xf32> to vector<31x128xf32>
    %145 = vector.extract_strided_slice %137 {offsets = [0, 0], sizes = [1, 128], strides = [1, 1]} : vector<32x128xf32> to vector<1x128xf32>
    %146 = tpu.concatenate %144, %145 in 0 : vector<31x128xf32>, vector<1x128xf32> -> vector<32x128xf32>
    %147 = tpu.concatenate %143, %137, %146 in 1 : vector<32x128xf32>, vector<32x128xf32>, vector<32x128xf32> -> vector<32x384xf32>
    %cst_47 = arith.constant dense<0.000000e+00> : vector<32x128xf32>
    %148 = tpu.matmul %147, %139, %cst_47 {dimension_numbers = #tpu.dot_dimension_numbers<[1], [0], [0], [1], [0, 0, 1, 1], [], []>} : vector<32x384xf32>, vector<384x128xf32>, vector<32x128xf32> -> vector<32x128xf32>
    %149 = vector.broadcast %140 : vector<1x128xf32> to vector<32x128xf32>
    %150 = arith.addf %148, %149 : vector<32x128xf32>
    %cst_48 = arith.constant 0.000000e+00 : f32
    %151 = vector.broadcast %cst_48 : f32 to vector<32x128xf32>
    %152 = arith.maximumf %150, %151 : vector<32x128xf32>
    %c0_49 = arith.constant 0 : index
    %c0_50 = arith.constant 0 : index
    %153 = vector.load %arg6[%c0_49, %c0_50] : memref<32x32xf32, #tpu.memory_space<vmem>>, vector<32x32xf32>
    %cst_51 = arith.constant dense<0.000000e+00> : vector<32x128xf32>
    %154 = tpu.matmul %153, %152, %cst_51 {dimension_numbers = #tpu.dot_dimension_numbers<[1], [0], [0], [1], [0, 0, 1, 1], [], []>} : vector<32x32xf32>, vector<32x128xf32>, vector<32x128xf32> -> vector<32x128xf32>
    %c0_52 = arith.constant 0 : index
    %c0_53 = arith.constant 0 : index
    %155 = vector.load %arg7[%c0_52, %c0_53] : memref<32x1xf32, #tpu.memory_space<vmem>>, vector<32x1xf32>
    %156 = vector.broadcast %155 : vector<32x1xf32> to vector<32x128xf32>
    %157 = arith.addf %154, %156 : vector<32x128xf32>
    %c0_54 = arith.constant 0 : index
    %c0_55 = arith.constant 0 : index
    %158 = vector.load %arg9[%c0_54, %c0_55] : memref<32x128xf32, #tpu.memory_space<vmem>>, vector<32x128xf32>
    tpu.vector_store %arg9[%c0_54, %c0_55], %157 {strides = array<i32>} : memref<32x128xf32, #tpu.memory_space<vmem>>, vector<32x128xf32>,
    return
  }
}

</mosaic_0001>

<llo_original>
// kernel: dpm_forward.1
$region0: #{dpm_forward.1}
  #allocation0 [shape = 'u32[]', space=smem, size = 0x4, offset = 0x4, fixed_abs, tag = 'smem constant byte address 0x4 - core index']
  #allocation1 [shape = 'u32[144,128]{1,0:T(1,128)}', space=vmem, size = 0x12000, scoped, tag = 'internal scratch']
  #allocation2 [shape = 'f32[32,128]{1,0:T(8,128)}', space=vmem, size = 0x4000, scoped, tag = 'scratch operand']
  #allocation3 [shape = 'f32[3,384,128]{2,1,0:T(8,128)}', space=vmem, size = 0x90000, scoped, tag = 'scratch operand']
  #allocation4 [shape = 's32[1]{0}', space=sflag, size = 0x4, scoped, tag = 'scratch operand']
  #allocation5 [shape = 's32[]', space=sflag, size = 0x4, offset = 0, fixed_abs, tag = 'sflag constant byte address 0x0 - dummy sync flag']
  %s0 = inlined_call_operand.vmem [shape: f32[12,512], index: 0, kind: input, shape index: {}]
  %s1 = inlined_call_operand.vmem [shape: f32[32,12], index: 1, kind: input, shape index: {}]
  %s2 = inlined_call_operand.vmem [shape: f32[32,8], index: 2, kind: input, shape index: {}]
  %s3 = inlined_call_operand.vmem [shape: f32[32,1], index: 3, kind: input, shape index: {}]
  %s4 = inlined_call_operand.vmem [shape: f32[3,384,128], index: 4, kind: input, shape index: {}]
  %s5 = inlined_call_operand.vmem [shape: f32[3,128], index: 5, kind: input, shape index: {}]
  %s6 = inlined_call_operand.vmem [shape: f32[32,32], index: 6, kind: input, shape index: {}]
  %s7 = inlined_call_operand.vmem [shape: f32[32,1], index: 7, kind: input, shape index: {}]
  %s8 = inlined_call_operand.vmem [shape: f32[32,1], index: 8, kind: input, shape index: {}]
  %s9 = inlined_call_operand.vmem [shape: f32[32,128], index: 9, kind: output, shape index: {}]
  %s10 = sld [smem:[#allocation0]]
  $region76: #{dpm_forward.1} parent=0
    _
  %s12 = ssub.s32 1, %s10
  %s13 = scalar_select 0, %s12, %s10
  // Predicated region
  $region2: #{dpm_forward.1} parent=0 // pred_check
    _
  $region3: #{dpm_forward.1} parent=0 // pred_check_branch
    %15 = sbr.rel (0) target = $region5
  $region4: #{dpm_forward.1} parent=0 // pred_region
    _
  $region5: #{dpm_forward.1} parent=0 // pred_fallthru
    _
  // Predicated region
  $region6: #{dpm_forward.1} parent=0 // pred_check
    _
  $region7: #{dpm_forward.1} parent=0 // pred_check_branch
    %17 = sbr.rel (0) target = $region9
  $region8: #{dpm_forward.1} parent=0 // pred_region
    _
  $region9: #{dpm_forward.1} parent=0 // pred_fallthru
    _
  // Predicated region
  $region10: #{dpm_forward.1} parent=0 // pred_check
    _
  $region11: #{dpm_forward.1} parent=0 // pred_check_branch
    %19 = sbr.rel (0) target = $region13
  $region12: #{dpm_forward.1} parent=0 // pred_region
    _
  $region13: #{dpm_forward.1} parent=0 // pred_fallthru
    _
  // Predicated region
  $region14: #{dpm_forward.1} parent=0 // pred_check
    _
  $region15: #{dpm_forward.1} parent=0 // pred_check_branch
    %21 = sbr.rel (0) target = $region17
  $region16: #{dpm_forward.1} parent=0 // pred_region
    _
  $region17: #{dpm_forward.1} parent=0 // pred_fallthru
    _
  // Predicated region
  $region18: #{dpm_forward.1} parent=0 // pred_check
    _
  $region19: #{dpm_forward.1} parent=0 // pred_check_branch
    %23 = sbr.rel (0) target = $region21
  $region20: #{dpm_forward.1} parent=0 // pred_region
    _
  $region21: #{dpm_forward.1} parent=0 // pred_fallthru
    _
  // Predicated region
  $region22: #{dpm_forward.1} parent=0 // pred_check
    _
  $region23: #{dpm_forward.1} parent=0 // pred_check_branch
    %25 = sbr.rel (0) target = $region25
  $region24: #{dpm_forward.1} parent=0 // pred_region
    _
  $region25: #{dpm_forward.1} parent=0 // pred_fallthru
    _
  // Predicated region
  $region26: #{dpm_forward.1} parent=0 // pred_check
    _
  $region27: #{dpm_forward.1} parent=0 // pred_check_branch
    %27 = sbr.rel (0) target = $region29
  $region28: #{dpm_forward.1} parent=0 // pred_region
    _
  $region29: #{dpm_forward.1} parent=0 // pred_fallthru
    _
  // Predicated region
  $region30: #{dpm_forward.1} parent=0 // pred_check
    _
  $region31: #{dpm_forward.1} parent=0 // pred_check_branch
    %29 = sbr.rel (0) target = $region33
  $region32: #{dpm_forward.1} parent=0 // pred_region
    _
  $region33: #{dpm_forward.1} parent=0 // pred_fallthru
    _
  %p31 = scmp.lt.u32.totalorder 1152, 8
  %p32 = pneg %p31
  // Predicated region
  $region34: #{dpm_forward.1} parent=0 // pred_check
    _
  $region35: #{dpm_forward.1} parent=0 // pred_check_branch
    %34 = sbr.rel (%p31) target = $region37
  $region36: #{dpm_forward.1} parent=0 // pred_region
    %s50 = sand.u32 1152, 7
    %p51 = scmp.eq.s32.totalorder %s50, 0
    // Predicated region
    $region49: #{dpm_forward.1} parent=36 // pred_check
      %p52 = pneg %p51
    $region50: #{dpm_forward.1} parent=36 // pred_check_branch
      %54 = sbr.rel (%p52) target = $region52
    $region51: #{dpm_forward.1} parent=36 // pred_region
      loop: start=0, step=1, limit=1
      $region53: #{dpm_forward.1} parent=51 // loop_pre_header
        _
      $region54: #{dpm_forward.1} parent=51 // loop_header
        %s56 = sphi 0, %s60
        %p57 = scmp.ge.s32.totalorder %s56, 1
        %s61 = sphi %s4, %s4
        %s62 = sphi [#allocation3], [#allocation3]
      $region55: #{dpm_forward.1} parent=51 // loop_header_branch
        %59 = sbr.rel (%p57) target = $region59
      $region56: #{dpm_forward.1} parent=51 // loop_body
        %v63 = vld [vmem:[%s61] sm:$0xff]
        %64 = vst [vmem:[%s62] sm:$0xff] %v63
        %v65 = vld [vmem:[%s61 + $0x8] sm:$0xff]
        %66 = vst [vmem:[%s62 + $0x8] sm:$0xff] %v65
        %v67 = vld [vmem:[%s61 + $0x10] sm:$0xff]
        %68 = vst [vmem:[%s62 + $0x10] sm:$0xff] %v67
        %v69 = vld [vmem:[%s61 + $0x18] sm:$0xff]
        %70 = vst [vmem:[%s62 + $0x18] sm:$0xff] %v69
        %v71 = vld [vmem:[%s61 + $0x20] sm:$0xff]
        %72 = vst [vmem:[%s62 + $0x20] sm:$0xff] %v71
        %v73 = vld [vmem:[%s61 + $0x28] sm:$0xff]
        %74 = vst [vmem:[%s62 + $0x28] sm:$0xff] %v73
        %v75 = vld [vmem:[%s61 + $0x30] sm:$0xff]
        %76 = vst [vmem:[%s62 + $0x30] sm:$0xff] %v75
        %v77 = vld [vmem:[%s61 + $0x38] sm:$0xff]
        %78 = vst [vmem:[%s62 + $0x38] sm:$0xff] %v77
        %v79 = vld [vmem:[%s61 + $0x40] sm:$0xff]
        %80 = vst [vmem:[%s62 + $0x40] sm:$0xff] %v79
        %v81 = vld [vmem:[%s61 + $0x48] sm:$0xff]
        %82 = vst [vmem:[%s62 + $0x48] sm:$0xff] %v81
        %v83 = vld [vmem:[%s61 + $0x50] sm:$0xff]
        %84 = vst [vmem:[%s62 + $0x50] sm:$0xff] %v83
        %v85 = vld [vmem:[%s61 + $0x58] sm:$0xff]
        %86 = vst [vmem:[%s62 + $0x58] sm:$0xff] %v85
        %v87 = vld [vmem:[%s61 + $0x60] sm:$0xff]
        %88 = vst [vmem:[%s62 + $0x60] sm:$0xff] %v87
        %v89 = vld [vmem:[%s61 + $0x68] sm:$0xff]
        %90 = vst [vmem:[%s62 + $0x68] sm:$0xff] %v89
        %v91 = vld [vmem:[%s61 + $0x70] sm:$0xff]
        %92 = vst [vmem:[%s62 + $0x70] sm:$0xff] %v91
        %v93 = vld [vmem:[%s61 + $0x78] sm:$0xff]
        %94 = vst [vmem:[%s62 + $0x78] sm:$0xff] %v93
        %v95 = vld [vmem:[%s61 + $0x80] sm:$0xff]
        %96 = vst [vmem:[%s62 + $0x80] sm:$0xff] %v95
        %v97 = vld [vmem:[%s61 + $0x88] sm:$0xff]
        %98 = vst [vmem:[%s62 + $0x88] sm:$0xff] %v97
        %v99 = vld [vmem:[%s61 + $0x90] sm:$0xff]
        %100 = vst [vmem:[%s62 + $0x90] sm:$0xff] %v99
        %v101 = vld [vmem:[%s61 + $0x98] sm:$0xff]
        %102 = vst [vmem:[%s62 + $0x98] sm:$0xff] %v101
        %v103 = vld [vmem:[%s61 + $0xa0] sm:$0xff]
        %104 = vst [vmem:[%s62 + $0xa0] sm:$0xff] %v103
        %v105 = vld [vmem:[%s61 + $0xa8] sm:$0xff]
        %106 = vst [vmem:[%s62 + $0xa8] sm:$0xff] %v105
        %v107 = vld [vmem:[%s61 + $0xb0] sm:$0xff]
        %108 = vst [vmem:[%s62 + $0xb0] sm:$0xff] %v107
        %v109 = vld [vmem:[%s61 + $0xb8] sm:$0xff]
        %110 = vst [vmem:[%s62 + $0xb8] sm:$0xff] %v109
        %v111 = vld [vmem:[%s61 + $0xc0] sm:$0xff]
        %112 = vst [vmem:[%s62 + $0xc0] sm:$0xff] %v111
        %v113 = vld [vmem:[%s61 + $0xc8] sm:$0xff]
        %114 = vst [vmem:[%s62 + $0xc8] sm:$0xff] %v113
        %v115 = vld [vmem:[%s61 + $0xd0] sm:$0xff]
        %116 = vst [vmem:[%s62 + $0xd0] sm:$0xff] %v115
        %v117 = vld [vmem:[%s61 + $0xd8] sm:$0xff]
        %118 = vst [vmem:[%s62 + $0xd8] sm:$0xff] %v117
        %v119 = vld [vmem:[%s61 + $0xe0] sm:$0xff]
        %120 = vst [vmem:[%s62 + $0xe0] sm:$0xff] %v119
        %v121 = vld [vmem:[%s61 + $0xe8] sm:$0xff]
        %122 = vst [vmem:[%s62 + $0xe8] sm:$0xff] %v121
        %v123 = vld [vmem:[%s61 + $0xf0] sm:$0xff]
        %124 = vst [vmem:[%s62 + $0xf0] sm:$0xff] %v123
        %v125 = vld [vmem:[%s61 + $0xf8] sm:$0xff]
        %126 = vst [vmem:[%s62 + $0xf8] sm:$0xff] %v125
        %v127 = vld [vmem:[%s61 + $0x100] sm:$0xff]
        %128 = vst [vmem:[%s62 + $0x100] sm:$0xff] %v127
        %v129 = vld [vmem:[%s61 + $0x108] sm:$0xff]
        %130 = vst [vmem:[%s62 + $0x108] sm:$0xff] %v129
        %v131 = vld [vmem:[%s61 + $0x110] sm:$0xff]
        %132 = vst [vmem:[%s62 + $0x110] sm:$0xff] %v131
        %v133 = vld [vmem:[%s61 + $0x118] sm:$0xff]
        %134 = vst [vmem:[%s62 + $0x118] sm:$0xff] %v133
        %v135 = vld [vmem:[%s61 + $0x120] sm:$0xff]
        %136 = vst [vmem:[%s62 + $0x120] sm:$0xff] %v135
        %v137 = vld [vmem:[%s61 + $0x128] sm:$0xff]
        %138 = vst [vmem:[%s62 + $0x128] sm:$0xff] %v137
        %v139 = vld [vmem:[%s61 + $0x130] sm:$0xff]
        %140 = vst [vmem:[%s62 + $0x130] sm:$0xff] %v139
        %v141 = vld [vmem:[%s61 + $0x138] sm:$0xff]
        %142 = vst [vmem:[%s62 + $0x138] sm:$0xff] %v141
        %v143 = vld [vmem:[%s61 + $0x140] sm:$0xff]
        %144 = vst [vmem:[%s62 + $0x140] sm:$0xff] %v143
        %v145 = vld [vmem:[%s61 + $0x148] sm:$0xff]
        %146 = vst [vmem:[%s62 + $0x148] sm:$0xff] %v145
        %v147 = vld [vmem:[%s61 + $0x150] sm:$0xff]
        %148 = vst [vmem:[%s62 + $0x150] sm:$0xff] %v147
        %v149 = vld [vmem:[%s61 + $0x158] sm:$0xff]
        %150 = vst [vmem:[%s62 + $0x158] sm:$0xff] %v149
        %v151 = vld [vmem:[%s61 + $0x160] sm:$0xff]
        %152 = vst [vmem:[%s62 + $0x160] sm:$0xff] %v151
        %v153 = vld [vmem:[%s61 + $0x168] sm:$0xff]
        %154 = vst [vmem:[%s62 + $0x168] sm:$0xff] %v153
        %v155 = vld [vmem:[%s61 + $0x170] sm:$0xff]
        %156 = vst [vmem:[%s62 + $0x170] sm:$0xff] %v155
        %v157 = vld [vmem:[%s61 + $0x178] sm:$0xff]
        %158 = vst [vmem:[%s62 + $0x178] sm:$0xff] %v157
        %v159 = vld [vmem:[%s61 + $0x180] sm:$0xff]
        %160 = vst [vmem:[%s62 + $0x180] sm:$0xff] %v159
        %v161 = vld [vmem:[%s61 + $0x188] sm:$0xff]
        %162 = vst [vmem:[%s62 + $0x188] sm:$0xff] %v161
        %v163 = vld [vmem:[%s61 + $0x190] sm:$0xff]
        %164 = vst [vmem:[%s62 + $0x190] sm:$0xff] %v163
        %v165 = vld [vmem:[%s61 + $0x198] sm:$0xff]
        %166 = vst [vmem:[%s62 + $0x198] sm:$0xff] %v165
        %v167 = vld [vmem:[%s61 + $0x1a0] sm:$0xff]
        %168 = vst [vmem:[%s62 + $0x1a0] sm:$0xff] %v167
        %v169 = vld [vmem:[%s61 + $0x1a8] sm:$0xff]
        %170 = vst [vmem:[%s62 + $0x1a8] sm:$0xff] %v169
        %v171 = vld [vmem:[%s61 + $0x1b0] sm:$0xff]
        %172 = vst [vmem:[%s62 + $0x1b0] sm:$0xff] %v171
        %v173 = vld [vmem:[%s61 + $0x1b8] sm:$0xff]
        %174 = vst [vmem:[%s62 + $0x1b8] sm:$0xff] %v173
        %v175 = vld [vmem:[%s61 + $0x1c0] sm:$0xff]
        %176 = vst [vmem:[%s62 + $0x1c0] sm:$0xff] %v175
        %v177 = vld [vmem:[%s61 + $0x1c8] sm:$0xff]
        %178 = vst [vmem:[%s62 + $0x1c8] sm:$0xff] %v177
        %v179 = vld [vmem:[%s61 + $0x1d0] sm:$0xff]
        %180 = vst [vmem:[%s62 + $0x1d0] sm:$0xff] %v179
        %v181 = vld [vmem:[%s61 + $0x1d8] sm:$0xff]
        %182 = vst [vmem:[%s62 + $0x1d8] sm:$0xff] %v181
        %v183 = vld [vmem:[%s61 + $0x1e0] sm:$0xff]
        %184 = vst [vmem:[%s62 + $0x1e0] sm:$0xff] %v183
        %v185 = vld [vmem:[%s61 + $0x1e8] sm:$0xff]
        %186 = vst [vmem:[%s62 + $0x1e8] sm:$0xff] %v185
        %v187 = vld [vmem:[%s61 + $0x1f0] sm:$0xff]
        %188 = vst [vmem:[%s62 + $0x1f0] sm:$0xff] %v187
        %v189 = vld [vmem:[%s61 + $0x1f8] sm:$0xff]
        %190 = vst [vmem:[%s62 + $0x1f8] sm:$0xff] %v189
        %v191 = vld [vmem:[%s61 + $0x200] sm:$0xff]
        %192 = vst [vmem:[%s62 + $0x200] sm:$0xff] %v191
        %v193 = vld [vmem:[%s61 + $0x208] sm:$0xff]
        %194 = vst [vmem:[%s62 + $0x208] sm:$0xff] %v193
        %v195 = vld [vmem:[%s61 + $0x210] sm:$0xff]
        %196 = vst [vmem:[%s62 + $0x210] sm:$0xff] %v195
        %v197 = vld [vmem:[%s61 + $0x218] sm:$0xff]
        %198 = vst [vmem:[%s62 + $0x218] sm:$0xff] %v197
        %v199 = vld [vmem:[%s61 + $0x220] sm:$0xff]
        %200 = vst [vmem:[%s62 + $0x220] sm:$0xff] %v199
        %v201 = vld [vmem:[%s61 + $0x228] sm:$0xff]
        %202 = vst [vmem:[%s62 + $0x228] sm:$0xff] %v201
        %v203 = vld [vmem:[%s61 + $0x230] sm:$0xff]
        %204 = vst [vmem:[%s62 + $0x230] sm:$0xff] %v203
        %v205 = vld [vmem:[%s61 + $0x238] sm:$0xff]
        %206 = vst [vmem:[%s62 + $0x238] sm:$0xff] %v205
        %v207 = vld [vmem:[%s61 + $0x240] sm:$0xff]
        %208 = vst [vmem:[%s62 + $0x240] sm:$0xff] %v207
        %v209 = vld [vmem:[%s61 + $0x248] sm:$0xff]
        %210 = vst [vmem:[%s62 + $0x248] sm:$0xff] %v209
        %v211 = vld [vmem:[%s61 + $0x250] sm:$0xff]
        %212 = vst [vmem:[%s62 + $0x250] sm:$0xff] %v211
        %v213 = vld [vmem:[%s61 + $0x258] sm:$0xff]
        %214 = vst [vmem:[%s62 + $0x258] sm:$0xff] %v213
        %v215 = vld [vmem:[%s61 + $0x260] sm:$0xff]
        %216 = vst [vmem:[%s62 + $0x260] sm:$0xff] %v215
        %v217 = vld [vmem:[%s61 + $0x268] sm:$0xff]
        %218 = vst [vmem:[%s62 + $0x268] sm:$0xff] %v217
        %v219 = vld [vmem:[%s61 + $0x270] sm:$0xff]
        %220 = vst [vmem:[%s62 + $0x270] sm:$0xff] %v219
        %v221 = vld [vmem:[%s61 + $0x278] sm:$0xff]
        %222 = vst [vmem:[%s62 + $0x278] sm:$0xff] %v221
        %v223 = vld [vmem:[%s61 + $0x280] sm:$0xff]
        %224 = vst [vmem:[%s62 + $0x280] sm:$0xff] %v223
        %v225 = vld [vmem:[%s61 + $0x288] sm:$0xff]
        %226 = vst [vmem:[%s62 + $0x288] sm:$0xff] %v225
        %v227 = vld [vmem:[%s61 + $0x290] sm:$0xff]
        %228 = vst [vmem:[%s62 + $0x290] sm:$0xff] %v227
        %v229 = vld [vmem:[%s61 + $0x298] sm:$0xff]
        %230 = vst [vmem:[%s62 + $0x298] sm:$0xff] %v229
        %v231 = vld [vmem:[%s61 + $0x2a0] sm:$0xff]
        %232 = vst [vmem:[%s62 + $0x2a0] sm:$0xff] %v231
        %v233 = vld [vmem:[%s61 + $0x2a8] sm:$0xff]
        %234 = vst [vmem:[%s62 + $0x2a8] sm:$0xff] %v233
        %v235 = vld [vmem:[%s61 + $0x2b0] sm:$0xff]
        %236 = vst [vmem:[%s62 + $0x2b0] sm:$0xff] %v235
        %v237 = vld [vmem:[%s61 + $0x2b8] sm:$0xff]
        %238 = vst [vmem:[%s62 + $0x2b8] sm:$0xff] %v237
        %v239 = vld [vmem:[%s61 + $0x2c0] sm:$0xff]
        %240 = vst [vmem:[%s62 + $0x2c0] sm:$0xff] %v239
        %v241 = vld [vmem:[%s61 + $0x2c8] sm:$0xff]
        %242 = vst [vmem:[%s62 + $0x2c8] sm:$0xff] %v241
        %v243 = vld [vmem:[%s61 + $0x2d0] sm:$0xff]
        %244 = vst [vmem:[%s62 + $0x2d0] sm:$0xff] %v243
        %v245 = vld [vmem:[%s61 + $0x2d8] sm:$0xff]
        %246 = vst [vmem:[%s62 + $0x2d8] sm:$0xff] %v245
        %v247 = vld [vmem:[%s61 + $0x2e0] sm:$0xff]
        %248 = vst [vmem:[%s62 + $0x2e0] sm:$0xff] %v247
        %v249 = vld [vmem:[%s61 + $0x2e8] sm:$0xff]
        %250 = vst [vmem:[%s62 + $0x2e8] sm:$0xff] %v249
        %v251 = vld [vmem:[%s61 + $0x2f0] sm:$0xff]
        %252 = vst [vmem:[%s62 + $0x2f0] sm:$0xff] %v251
        %v253 = vld [vmem:[%s61 + $0x2f8] sm:$0xff]
        %254 = vst [vmem:[%s62 + $0x2f8] sm:$0xff] %v253
        %v255 = vld [vmem:[%s61 + $0x300] sm:$0xff]
        %256 = vst [vmem:[%s62 + $0x300] sm:$0xff] %v255
        %v257 = vld [vmem:[%s61 + $0x308] sm:$0xff]
        %258 = vst [vmem:[%s62 + $0x308] sm:$0xff] %v257
        %v259 = vld [vmem:[%s61 + $0x310] sm:$0xff]
        %260 = vst [vmem:[%s62 + $0x310] sm:$0xff] %v259
        %v261 = vld [vmem:[%s61 + $0x318] sm:$0xff]
        %262 = vst [vmem:[%s62 + $0x318] sm:$0xff] %v261
        %v263 = vld [vmem:[%s61 + $0x320] sm:$0xff]
        %264 = vst [vmem:[%s62 + $0x320] sm:$0xff] %v263
        %v265 = vld [vmem:[%s61 + $0x328] sm:$0xff]
        %266 = vst [vmem:[%s62 + $0x328] sm:$0xff] %v265
        %v267 = vld [vmem:[%s61 + $0x330] sm:$0xff]
        %268 = vst [vmem:[%s62 + $0x330] sm:$0xff] %v267
        %v269 = vld [vmem:[%s61 + $0x338] sm:$0xff]
        %270 = vst [vmem:[%s62 + $0x338] sm:$0xff] %v269
        %v271 = vld [vmem:[%s61 + $0x340] sm:$0xff]
        %272 = vst [vmem:[%s62 + $0x340] sm:$0xff] %v271
        %v273 = vld [vmem:[%s61 + $0x348] sm:$0xff]
        %274 = vst [vmem:[%s62 + $0x348] sm:$0xff] %v273
        %v275 = vld [vmem:[%s61 + $0x350] sm:$0xff]
        %276 = vst [vmem:[%s62 + $0x350] sm:$0xff] %v275
        %v277 = vld [vmem:[%s61 + $0x358] sm:$0xff]
        %278 = vst [vmem:[%s62 + $0x358] sm:$0xff] %v277
        %v279 = vld [vmem:[%s61 + $0x360] sm:$0xff]
        %280 = vst [vmem:[%s62 + $0x360] sm:$0xff] %v279
        %v281 = vld [vmem:[%s61 + $0x368] sm:$0xff]
        %282 = vst [vmem:[%s62 + $0x368] sm:$0xff] %v281
        %v283 = vld [vmem:[%s61 + $0x370] sm:$0xff]
        %284 = vst [vmem:[%s62 + $0x370] sm:$0xff] %v283
        %v285 = vld [vmem:[%s61 + $0x378] sm:$0xff]
        %286 = vst [vmem:[%s62 + $0x378] sm:$0xff] %v285
        %v287 = vld [vmem:[%s61 + $0x380] sm:$0xff]
        %288 = vst [vmem:[%s62 + $0x380] sm:$0xff] %v287
        %v289 = vld [vmem:[%s61 + $0x388] sm:$0xff]
        %290 = vst [vmem:[%s62 + $0x388] sm:$0xff] %v289
        %v291 = vld [vmem:[%s61 + $0x390] sm:$0xff]
        %292 = vst [vmem:[%s62 + $0x390] sm:$0xff] %v291
        %v293 = vld [vmem:[%s61 + $0x398] sm:$0xff]
        %294 = vst [vmem:[%s62 + $0x398] sm:$0xff] %v293
        %v295 = vld [vmem:[%s61 + $0x3a0] sm:$0xff]
        %296 = vst [vmem:[%s62 + $0x3a0] sm:$0xff] %v295
        %v297 = vld [vmem:[%s61 + $0x3a8] sm:$0xff]
        %298 = vst [vmem:[%s62 + $0x3a8] sm:$0xff] %v297
        %v299 = vld [vmem:[%s61 + $0x3b0] sm:$0xff]
        %300 = vst [vmem:[%s62 + $0x3b0] sm:$0xff] %v299
        %v301 = vld [vmem:[%s61 + $0x3b8] sm:$0xff]
        %302 = vst [vmem:[%s62 + $0x3b8] sm:$0xff] %v301
        %v303 = vld [vmem:[%s61 + $0x3c0] sm:$0xff]
        %304 = vst [vmem:[%s62 + $0x3c0] sm:$0xff] %v303
        %v305 = vld [vmem:[%s61 + $0x3c8] sm:$0xff]
        %306 = vst [vmem:[%s62 + $0x3c8] sm:$0xff] %v305
        %v307 = vld [vmem:[%s61 + $0x3d0] sm:$0xff]
        %308 = vst [vmem:[%s62 + $0x3d0] sm:$0xff] %v307
        %v309 = vld [vmem:[%s61 + $0x3d8] sm:$0xff]
        %310 = vst [vmem:[%s62 + $0x3d8] sm:$0xff] %v309
        %v311 = vld [vmem:[%s61 + $0x3e0] sm:$0xff]
        %312 = vst [vmem:[%s62 + $0x3e0] sm:$0xff] %v311
        %v313 = vld [vmem:[%s61 + $0x3e8] sm:$0xff]
        %314 = vst [vmem:[%s62 + $0x3e8] sm:$0xff] %v313
        %v315 = vld [vmem:[%s61 + $0x3f0] sm:$0xff]
        %316 = vst [vmem:[%s62 + $0x3f0] sm:$0xff] %v315
        %v317 = vld [vmem:[%s61 + $0x3f8] sm:$0xff]
        %318 = vst [vmem:[%s62 + $0x3f8] sm:$0xff] %v317
        %v319 = vld [vmem:[%s61 + $0x400] sm:$0xff]
        %320 = vst [vmem:[%s62 + $0x400] sm:$0xff] %v319
        %v321 = vld [vmem:[%s61 + $0x408] sm:$0xff]
        %322 = vst [vmem:[%s62 + $0x408] sm:$0xff] %v321
        %v323 = vld [vmem:[%s61 + $0x410] sm:$0xff]
        %324 = vst [vmem:[%s62 + $0x410] sm:$0xff] %v323
        %v325 = vld [vmem:[%s61 + $0x418] sm:$0xff]
        %326 = vst [vmem:[%s62 + $0x418] sm:$0xff] %v325
        %v327 = vld [vmem:[%s61 + $0x420] sm:$0xff]
        %328 = vst [vmem:[%s62 + $0x420] sm:$0xff] %v327
        %v329 = vld [vmem:[%s61 + $0x428] sm:$0xff]
        %330 = vst [vmem:[%s62 + $0x428] sm:$0xff] %v329
        %v331 = vld [vmem:[%s61 + $0x430] sm:$0xff]
        %332 = vst [vmem:[%s62 + $0x430] sm:$0xff] %v331
        %v333 = vld [vmem:[%s61 + $0x438] sm:$0xff]
        %334 = vst [vmem:[%s62 + $0x438] sm:$0xff] %v333
        %v335 = vld [vmem:[%s61 + $0x440] sm:$0xff]
        %336 = vst [vmem:[%s62 + $0x440] sm:$0xff] %v335
        %v337 = vld [vmem:[%s61 + $0x448] sm:$0xff]
        %338 = vst [vmem:[%s62 + $0x448] sm:$0xff] %v337
        %v339 = vld [vmem:[%s61 + $0x450] sm:$0xff]
        %340 = vst [vmem:[%s62 + $0x450] sm:$0xff] %v339
        %v341 = vld [vmem:[%s61 + $0x458] sm:$0xff]
        %342 = vst [vmem:[%s62 + $0x458] sm:$0xff] %v341
        %v343 = vld [vmem:[%s61 + $0x460] sm:$0xff]
        %344 = vst [vmem:[%s62 + $0x460] sm:$0xff] %v343
        %v345 = vld [vmem:[%s61 + $0x468] sm:$0xff]
        %346 = vst [vmem:[%s62 + $0x468] sm:$0xff] %v345
        %v347 = vld [vmem:[%s61 + $0x470] sm:$0xff]
        %348 = vst [vmem:[%s62 + $0x470] sm:$0xff] %v347
        %v349 = vld [vmem:[%s61 + $0x478] sm:$0xff]
        %350 = vst [vmem:[%s62 + $0x478] sm:$0xff] %v349
      $region57: #{dpm_forward.1} parent=51 // loop_footer
        %s60 = sadd.s32 1, %s56
      $region58: #{dpm_forward.1} parent=51 // loop_footer_branch
        %55 = sbr.rel target = $region54
      $region59: #{dpm_forward.1} parent=51 // loop_exit
        _
    $region52: #{dpm_forward.1} parent=36 // pred_fallthru
      _
    %p351 = pneg %p51
    // Predicated region
    $region60: #{dpm_forward.1} parent=36 // pred_check
      _
    $region61: #{dpm_forward.1} parent=36 // pred_check_branch
      %353 = sbr.rel (%p51) target = $region63
    $region62: #{dpm_forward.1} parent=36 // pred_region
      %s354 = sand.u32 1152, 7
    $region63: #{dpm_forward.1} parent=36 // pred_fallthru
      _
  $region37: #{dpm_forward.1} parent=0 // pred_fallthru
    _
  // Predicated region
  $region38: #{dpm_forward.1} parent=0 // pred_check
    %p35 = pneg %p31
  $region39: #{dpm_forward.1} parent=0 // pred_check_branch
    %37 = sbr.rel (%p35) target = $region41
  $region40: #{dpm_forward.1} parent=0 // pred_region
    %s38 = sshll.u32 1, 1152
    %s39 = ssub.s32 %s38, 1
    loop: start=0, step=1, limit=1
    $region42: #{dpm_forward.1} parent=40 // loop_pre_header
      _
    $region43: #{dpm_forward.1} parent=40 // loop_header
      %s41 = sphi 0, %s45
      %p42 = scmp.ge.s32.totalorder %s41, 1
      %s46 = sphi %s4, %s4
      %s47 = sphi [#allocation3], [#allocation3]
    $region44: #{dpm_forward.1} parent=40 // loop_header_branch
      %44 = sbr.rel (%p42) target = $region48
    $region45: #{dpm_forward.1} parent=40 // loop_body
      %v48 = vld [vmem:[%s46] sm:%s39]
      %49 = vst [vmem:[%s47] sm:%s39] %v48
    $region46: #{dpm_forward.1} parent=40 // loop_footer
      %s45 = sadd.s32 1, %s41
    $region47: #{dpm_forward.1} parent=40 // loop_footer_branch
      %40 = sbr.rel target = $region43
    $region48: #{dpm_forward.1} parent=40 // loop_exit
      _
  $region41: #{dpm_forward.1} parent=0 // pred_fallthru
    _
  // Predicated region
  $region64: #{dpm_forward.1} parent=0 // pred_check
    _
  $region65: #{dpm_forward.1} parent=0 // pred_check_branch
    %357 = sbr.rel (0) target = $region67
  $region66: #{dpm_forward.1} parent=0 // pred_region
    %358 = vsyncadd [#allocation4], 18432
  $region67: #{dpm_forward.1} parent=0 // pred_fallthru
    _
  %v359 = vld [vmem:[%s1] sm:$0xff]
  %v360 = vld [vmem:[%s1 + $0x8] sm:$0xff]
  %v361 = vld [vmem:[%s1 + $0x10] sm:$0xff]
  %v362 = vld [vmem:[%s1 + $0x18] sm:$0xff]
  %v363 = vld [vmem:[%s0] sm:$0xff]
  %v364 = vld [vmem:[%s0 + $0x8] sm:$0xff]
  %v365 = vld [vmem:[%s0 + $0x10] sm:$0xff]
  %v366 = vld [vmem:[%s0 + $0x18] sm:$0xff]
  %v367 = vld [vmem:[%s0 + $0x20] sm:$0xf]
  %v368 = vld [vmem:[%s0 + $0x28] sm:$0xf]
  %v369 = vld [vmem:[%s0 + $0x30] sm:$0xf]
  %v370 = vld [vmem:[%s0 + $0x38] sm:$0xf]
  %v371 = vld [vmem:[%s3] sm:$0xff]
  %v372 = vld [vmem:[%s3 + $0x8] sm:$0xff]
  %v373 = vld [vmem:[%s3 + $0x10] sm:$0xff]
  %v374 = vld [vmem:[%s3 + $0x18] sm:$0xff]
  %376 = vset.pattern.permute.xlu0 0
  %377 = vperm.xlu0 %376, %v371
  %v378 = vpop.permute.xlu0 %377
  %381 = vset.pattern.permute.xlu0 0
  %382 = vperm.xlu0 %381, %v372
  %v383 = vpop.permute.xlu0 %382
  %386 = vset.pattern.permute.xlu0 0
  %387 = vperm.xlu0 %386, %v373
  %v388 = vpop.permute.xlu0 %387
  %391 = vset.pattern.permute.xlu0 0
  %392 = vperm.xlu0 %391, %v374
  %v393 = vpop.permute.xlu0 %392
  %vm395 = vcmask 97280
  %v397 = vsel %vm395, %v359, 0
  %v400 = vsel %vm395, %v360, 0
  %v403 = vsel %vm395, %v361, 0
  %v406 = vsel %vm395, %v362, 0
  %vm408 = vcmask 1043456
  %v410 = vsel %vm408, %v367, 0
  %v413 = vsel %vm408, %v368, 0
  %v416 = vsel %vm408, %v369, 0
  %v419 = vsel %vm408, %v370, 0
  %421 = vmatprep.subr.mxu0 0.0
  %422 = vmatpush1.msra.mxu0 0.0
  %423 = vmatprep.subr.mxu0 0.0
  %424 = vmatpush1.msra.mxu0 0.0
  %425 = vmatprep.subr.mxu0 0.0
  %426 = vmatpush1.msra.mxu0 0.0
  %427 = vmatprep.subr.mxu0 0.0
  %428 = vmatpush1.msra.mxu0 0.0
  %429 = vmatprep.subr.mxu0 0.0
  %430 = vmatpush1.msra.mxu0 0.0
  %431 = vmatprep.subr.mxu0 0.0
  %432 = vmatpush1.msra.mxu0 0.0
  %433 = vmatprep.subr.mxu0 0.0
  %434 = vmatpush1.msra.mxu0 0.0
  %435 = vmatprep.subr.mxu0 0.0
  %436 = vmatpush1.msra.mxu0 0.0
  %437 = vmatprep.subr.mxu0 0.0
  %438 = vmatpush1.msra.mxu0 0.0
  %439 = vmatprep.subr.mxu0 0.0
  %440 = vmatpush1.msra.mxu0 0.0
  %441 = vmatprep.subr.mxu0 0.0
  %442 = vmatpush1.msra.mxu0 0.0
  %443 = vmatprep.subr.mxu0 0.0
  %444 = vmatpush1.msra.mxu0 0.0
  %445 = vmatprep.subr.mxu0 0.0
  %446 = vmatpush1.msra.mxu0 0.0
  %447 = vmatprep.subr.mxu0 0.0
  %448 = vmatpush1.msra.mxu0 0.0
  %449 = vmatprep.subr.mxu0 %v413
  %450 = vmatpush1.msra.mxu0 %v410
  %451 = vmatprep.subr.mxu0 %v364
  %452 = vmatpush1.msra.mxu0 %v363
  %453 = vmatprep.subr.mxu0 0.0
  %454 = vmatpush2.msra.mxu0 0.0
  %455 = vmatprep.subr.mxu0 0.0
  %456 = vmatpush2.msra.mxu0 0.0
  %457 = vmatprep.subr.mxu0 0.0
  %458 = vmatpush2.msra.mxu0 0.0
  %459 = vmatprep.subr.mxu0 0.0
  %460 = vmatpush2.msra.mxu0 0.0
  %461 = vmatprep.subr.mxu0 0.0
  %462 = vmatpush2.msra.mxu0 0.0
  %463 = vmatprep.subr.mxu0 0.0
  %464 = vmatpush2.msra.mxu0 0.0
  %465 = vmatprep.subr.mxu0 0.0
  %466 = vmatpush2.msra.mxu0 0.0
  %467 = vmatprep.subr.mxu0 0.0
  %468 = vmatpush2.msra.mxu0 0.0
  %469 = vmatprep.subr.mxu0 0.0
  %470 = vmatpush2.msra.mxu0 0.0
  %471 = vmatprep.subr.mxu0 0.0
  %472 = vmatpush2.msra.mxu0 0.0
  %473 = vmatprep.subr.mxu0 0.0
  %474 = vmatpush2.msra.mxu0 0.0
  %475 = vmatprep.subr.mxu0 0.0
  %476 = vmatpush2.msra.mxu0 0.0
  %477 = vmatprep.subr.mxu0 0.0
  %478 = vmatpush2.msra.mxu0 0.0
  %479 = vmatprep.subr.mxu0 0.0
  %480 = vmatpush2.msra.mxu0 0.0
  %481 = vmatprep.subr.mxu0 0.0
  %482 = vmatpush2.msra.mxu0 0.0
  %483 = vmatprep.subr.mxu0 0.0
  %484 = vmatpush2.msra.mxu0 0.0
  %485 = vmatprep.mubr.f32.mxu0 0.0
  %486 = vmatmul.mubr.f32.gmra.mxu0 %v397
  %v487 = vpop.f32.mrf.mxu0
  %v488 = vadd.f32 %v378, %v487
  %v489 = vpop.f32.mrf.mxu0
  %v490 = vadd.f32 %v378, %v489
  %491 = vmatprep.mubr.f32.mxu0 0.0
  %492 = vmatmul.mubr.f32.gmra.mxu0 %v400
  %v493 = vpop.f32.mrf.mxu0
  %v494 = vadd.f32 %v383, %v493
  %v495 = vpop.f32.mrf.mxu0
  %v496 = vadd.f32 %v383, %v495
  %497 = vmatprep.mubr.f32.mxu0 0.0
  %498 = vmatmul.mubr.f32.gmra.mxu0 %v403
  %v499 = vpop.f32.mrf.mxu0
  %v500 = vadd.f32 %v388, %v499
  %v501 = vpop.f32.mrf.mxu0
  %v502 = vadd.f32 %v388, %v501
  %503 = vmatprep.mubr.f32.mxu0 0.0
  %504 = vmatmul.mubr.f32.gmra.mxu0 %v406
  %v505 = vpop.f32.mrf.mxu0
  %v506 = vadd.f32 %v393, %v505
  %v507 = vpop.f32.mrf.mxu0
  %v508 = vadd.f32 %v393, %v507
  %509 = vdwg.mxu0
  %510 = vmatprep.subr.mxu0 0.0
  %511 = vmatpush1.msra.mxu0 0.0
  %512 = vmatprep.subr.mxu0 0.0
  %513 = vmatpush1.msra.mxu0 0.0
  %514 = vmatprep.subr.mxu0 0.0
  %515 = vmatpush1.msra.mxu0 0.0
  %516 = vmatprep.subr.mxu0 0.0
  %517 = vmatpush1.msra.mxu0 0.0
  %518 = vmatprep.subr.mxu0 0.0
  %519 = vmatpush1.msra.mxu0 0.0
  %520 = vmatprep.subr.mxu0 0.0
  %521 = vmatpush1.msra.mxu0 0.0
  %522 = vmatprep.subr.mxu0 0.0
  %523 = vmatpush1.msra.mxu0 0.0
  %524 = vmatprep.subr.mxu0 0.0
  %525 = vmatpush1.msra.mxu0 0.0
  %526 = vmatprep.subr.mxu0 0.0
  %527 = vmatpush1.msra.mxu0 0.0
  %528 = vmatprep.subr.mxu0 0.0
  %529 = vmatpush1.msra.mxu0 0.0
  %530 = vmatprep.subr.mxu0 0.0
  %531 = vmatpush1.msra.mxu0 0.0
  %532 = vmatprep.subr.mxu0 0.0
  %533 = vmatpush1.msra.mxu0 0.0
  %534 = vmatprep.subr.mxu0 0.0
  %535 = vmatpush1.msra.mxu0 0.0
  %536 = vmatprep.subr.mxu0 0.0
  %537 = vmatpush1.msra.mxu0 0.0
  %538 = vmatprep.subr.mxu0 %v419
  %539 = vmatpush1.msra.mxu0 %v416
  %540 = vmatprep.subr.mxu0 %v366
  %541 = vmatpush1.msra.mxu0 %v365
  %542 = vmatprep.subr.mxu0 0.0
  %543 = vmatpush2.msra.mxu0 0.0
  %544 = vmatprep.subr.mxu0 0.0
  %545 = vmatpush2.msra.mxu0 0.0
  %546 = vmatprep.subr.mxu0 0.0
  %547 = vmatpush2.msra.mxu0 0.0
  %548 = vmatprep.subr.mxu0 0.0
  %549 = vmatpush2.msra.mxu0 0.0
  %550 = vmatprep.subr.mxu0 0.0
  %551 = vmatpush2.msra.mxu0 0.0
  %552 = vmatprep.subr.mxu0 0.0
  %553 = vmatpush2.msra.mxu0 0.0
  %554 = vmatprep.subr.mxu0 0.0
  %555 = vmatpush2.msra.mxu0 0.0
  %556 = vmatprep.subr.mxu0 0.0
  %557 = vmatpush2.msra.mxu0 0.0
  %558 = vmatprep.subr.mxu0 0.0
  %559 = vmatpush2.msra.mxu0 0.0
  %560 = vmatprep.subr.mxu0 0.0
  %561 = vmatpush2.msra.mxu0 0.0
  %562 = vmatprep.subr.mxu0 0.0
  %563 = vmatpush2.msra.mxu0 0.0
  %564 = vmatprep.subr.mxu0 0.0
  %565 = vmatpush2.msra.mxu0 0.0
  %566 = vmatprep.subr.mxu0 0.0
  %567 = vmatpush2.msra.mxu0 0.0
  %568 = vmatprep.subr.mxu0 0.0
  %569 = vmatpush2.msra.mxu0 0.0
  %570 = vmatprep.subr.mxu0 0.0
  %571 = vmatpush2.msra.mxu0 0.0
  %572 = vmatprep.subr.mxu0 0.0
  %573 = vmatpush2.msra.mxu0 0.0
  %574 = vmatprep.mubr.f32.mxu0 0.0
  %575 = vmatmul.mubr.f32.gmra.mxu0 %v397
  %v576 = vpop.f32.mrf.mxu0
  %v577 = vadd.f32 %v378, %v576
  %v578 = vpop.f32.mrf.mxu0
  %v579 = vadd.f32 %v378, %v578
  %580 = vmatprep.mubr.f32.mxu0 0.0
  %581 = vmatmul.mubr.f32.gmra.mxu0 %v400
  %v582 = vpop.f32.mrf.mxu0
  %v583 = vadd.f32 %v383, %v582
  %v584 = vpop.f32.mrf.mxu0
  %v585 = vadd.f32 %v383, %v584
  %586 = vmatprep.mubr.f32.mxu0 0.0
  %587 = vmatmul.mubr.f32.gmra.mxu0 %v403
  %v588 = vpop.f32.mrf.mxu0
  %v589 = vadd.f32 %v388, %v588
  %v590 = vpop.f32.mrf.mxu0
  %v591 = vadd.f32 %v388, %v590
  %592 = vmatprep.mubr.f32.mxu0 0.0
  %593 = vmatmul.mubr.f32.gmra.mxu0 %v406
  %v594 = vpop.f32.mrf.mxu0
  %v595 = vadd.f32 %v393, %v594
  %v596 = vpop.f32.mrf.mxu0
  %v597 = vadd.f32 %v393, %v596
  %598 = vdwg.mxu0
  %v599 = vld [vmem:[%s2] sm:$0xff]
  %v600 = vld [vmem:[%s2 + $0x8] sm:$0xff]
  %v601 = vld [vmem:[%s2 + $0x10] sm:$0xff]
  %v602 = vld [vmem:[%s2 + $0x18] sm:$0xff]
  %vm603 = vcmask 64512
  %v605 = vsel %vm603, %v599, 0
  %v608 = vsel %vm603, %v600, 0
  %v611 = vsel %vm603, %v601, 0
  %v614 = vsel %vm603, %v602, 0
  %616 = vmatprep.subr.mxu0 0.0
  %617 = vmatpush1.msra.mxu0 0.0
  %618 = vmatprep.subr.mxu0 0.0
  %619 = vmatpush1.msra.mxu0 0.0
  %620 = vmatprep.subr.mxu0 0.0
  %621 = vmatpush1.msra.mxu0 0.0
  %622 = vmatprep.subr.mxu0 0.0
  %623 = vmatpush1.msra.mxu0 0.0
  %624 = vmatprep.subr.mxu0 0.0
  %625 = vmatpush1.msra.mxu0 0.0
  %626 = vmatprep.subr.mxu0 0.0
  %627 = vmatpush1.msra.mxu0 0.0
  %628 = vmatprep.subr.mxu0 0.0
  %629 = vmatpush1.msra.mxu0 0.0
  %630 = vmatprep.subr.mxu0 0.0
  %631 = vmatpush1.msra.mxu0 0.0
  %632 = vmatprep.subr.mxu0 0.0
  %633 = vmatpush1.msra.mxu0 0.0
  %634 = vmatprep.subr.mxu0 0.0
  %635 = vmatpush1.msra.mxu0 0.0
  %636 = vmatprep.subr.mxu0 0.0
  %637 = vmatpush1.msra.mxu0 0.0
  %638 = vmatprep.subr.mxu0 0.0
  %639 = vmatpush1.msra.mxu0 0.0
  %640 = vmatprep.subr.mxu0 0.0
  %641 = vmatpush1.msra.mxu0 0.0
  %642 = vmatprep.subr.mxu0 0.0
  %643 = vmatpush1.msra.mxu0 0.0
  %644 = vmatprep.subr.mxu0 0.0
  %645 = vmatpush1.msra.mxu0 0.0
  %646 = vmatprep.subr.mxu0 0.0
  %647 = vmatpush1.msra.mxu0 0.0
  %648 = vmatprep.subr.mxu0 0.0
  %649 = vmatpush2.msra.mxu0 0.0
  %650 = vmatprep.subr.mxu0 0.0
  %651 = vmatpush2.msra.mxu0 0.0
  %652 = vmatprep.subr.mxu0 0.0
  %653 = vmatpush2.msra.mxu0 0.0
  %654 = vmatprep.subr.mxu0 0.0
  %655 = vmatpush2.msra.mxu0 0.0
  %656 = vmatprep.subr.mxu0 0.0
  %657 = vmatpush2.msra.mxu0 0.0
  %658 = vmatprep.subr.mxu0 0.0
  %659 = vmatpush2.msra.mxu0 0.0
  %660 = vmatprep.subr.mxu0 0.0
  %661 = vmatpush2.msra.mxu0 0.0
  %662 = vmatprep.subr.mxu0 0.0
  %663 = vmatpush2.msra.mxu0 0.0
  %664 = vmatprep.subr.mxu0 0.0
  %665 = vmatpush2.msra.mxu0 0.0
  %666 = vmatprep.subr.mxu0 0.0
  %667 = vmatpush2.msra.mxu0 0.0
  %668 = vmatprep.subr.mxu0 0.0
  %669 = vmatpush2.msra.mxu0 0.0
  %670 = vmatprep.subr.mxu0 0.0
  %671 = vmatpush2.msra.mxu0 0.0
  %672 = vmatprep.subr.mxu0 0.0
  %673 = vmatpush2.msra.mxu0 0.0
  %674 = vmatprep.subr.mxu0 0.0
  %675 = vmatpush2.msra.mxu0 0.0
  %676 = vmatprep.subr.mxu0 0.0
  %677 = vmatpush2.msra.mxu0 0.0
  %678 = vmatprep.subr.mxu0 0.0
  %679 = vmatpush2.msra.mxu0 0.0
  %680 = vmatprep.mubr.f32.mxu0 0.0
  %681 = vmatmul.mubr.f32.gmra.mxu0 %v605
  %v682 = vpop.f32.mrf.mxu0
  %v683 = vadd.f32 0.0, %v682
  %v684 = vpop.f32.mrf.mxu0
  %685 = vmatprep.mubr.f32.mxu0 0.0
  %686 = vmatmul.mubr.f32.gmra.mxu0 %v608
  %v687 = vpop.f32.mrf.mxu0
  %v688 = vadd.f32 0.0, %v687
  %v689 = vpop.f32.mrf.mxu0
  %690 = vmatprep.mubr.f32.mxu0 0.0
  %691 = vmatmul.mubr.f32.gmra.mxu0 %v611
  %v692 = vpop.f32.mrf.mxu0
  %v693 = vadd.f32 0.0, %v692
  %v694 = vpop.f32.mrf.mxu0
  %695 = vmatprep.mubr.f32.mxu0 0.0
  %696 = vmatmul.mubr.f32.gmra.mxu0 %v614
  %v697 = vpop.f32.mrf.mxu0
  %v698 = vadd.f32 0.0, %v697
  %v699 = vpop.f32.mrf.mxu0
  %700 = vdwg.mxu0
  %v701 = vadd.f32 %v488, %v683
  %v702 = vadd.f32 %v494, %v688
  %v703 = vadd.f32 %v500, %v693
  %v704 = vadd.f32 %v506, %v698
  %v705 = vxor.u32 %v701, 2147483648
  %v706 = vxor.u32 %v702, 2147483648
  %v707 = vxor.u32 %v703, 2147483648
  %v708 = vxor.u32 %v704, 2147483648
  %v709 = vmul.f32 %v705, 1.442695
  %v710 = vpow.pop %v709
  %v711 = vmul.f32 %v706, 1.442695
  %v712 = vpow.pop %v711
  %v713 = vmul.f32 %v707, 1.442695
  %v714 = vpow.pop %v713
  %v715 = vmul.f32 %v708, 1.442695
  %v716 = vpow.pop %v715
  %v717 = vadd.f32 %v710, 1.0
  %v718 = vadd.f32 %v712, 1.0
  %v719 = vadd.f32 %v714, 1.0
  %v720 = vadd.f32 %v716, 1.0
  %v721 = vrcp.pop %v717
  %v722 = vmul.f32 1.0, %v721
  %v723 = vrcp.pop %v718
  %v724 = vmul.f32 1.0, %v723
  %v725 = vrcp.pop %v719
  %v726 = vmul.f32 1.0, %v725
  %v727 = vrcp.pop %v720
  %v728 = vmul.f32 1.0, %v727
  %v729 = vmul.f32 %v726, 2.0
  %v730 = vsub.f32 %v729, 1.0
  %v731 = vmul.f32 %v724, 0.0
  %v732 = vmul.f32 %v722, %v730
  %v733 = vadd.f32 %v731, %v732
  %v734 = vtanh.pop %v733
  %v735 = vmul.f32 %v728, %v734
  %v736 = vtanh.pop %v735
  %737 = vst [vmem:[#allocation2] sm:$0xff] %v736
  %738 = vmatprep.subr.mxu0 0.0
  %739 = vmatpush1.msra.mxu0 0.0
  %740 = vmatprep.subr.mxu0 0.0
  %741 = vmatpush1.msra.mxu0 0.0
  %742 = vmatprep.subr.mxu0 0.0
  %743 = vmatpush1.msra.mxu0 0.0
  %744 = vmatprep.subr.mxu0 0.0
  %745 = vmatpush1.msra.mxu0 0.0
  %746 = vmatprep.subr.mxu0 0.0
  %747 = vmatpush1.msra.mxu0 0.0
  %748 = vmatprep.subr.mxu0 0.0
  %749 = vmatpush1.msra.mxu0 0.0
  %750 = vmatprep.subr.mxu0 0.0
  %751 = vmatpush1.msra.mxu0 0.0
  %752 = vmatprep.subr.mxu0 0.0
  %753 = vmatpush1.msra.mxu0 0.0
  %754 = vmatprep.subr.mxu0 0.0
  %755 = vmatpush1.msra.mxu0 0.0
  %756 = vmatprep.subr.mxu0 0.0
  %757 = vmatpush1.msra.mxu0 0.0
  %758 = vmatprep.subr.mxu0 0.0
  %759 = vmatpush1.msra.mxu0 0.0
  %760 = vmatprep.subr.mxu0 0.0
  %761 = vmatpush1.msra.mxu0 0.0
  %762 = vmatprep.subr.mxu0 0.0
  %763 = vmatpush1.msra.mxu0 0.0
  %764 = vmatprep.subr.mxu0 0.0
  %765 = vmatpush1.msra.mxu0 0.0
  %766 = vmatprep.subr.mxu0 0.0
  %767 = vmatpush1.msra.mxu0 0.0
  %768 = vmatprep.subr.mxu0 0.0
  %769 = vmatpush1.msra.mxu0 %v736
  %770 = vmatprep.subr.mxu0 0.0
  %771 = vmatpush2.msra.mxu0 0.0
  %772 = vmatprep.subr.mxu0 0.0
  %773 = vmatpush2.msra.mxu0 0.0
  %774 = vmatprep.subr.mxu0 0.0
  %775 = vmatpush2.msra.mxu0 0.0
  %776 = vmatprep.subr.mxu0 0.0
  %777 = vmatpush2.msra.mxu0 0.0
  %778 = vmatprep.subr.mxu0 0.0
  %779 = vmatpush2.msra.mxu0 0.0
  %780 = vmatprep.subr.mxu0 0.0
  %781 = vmatpush2.msra.mxu0 0.0
  %782 = vmatprep.subr.mxu0 0.0
  %783 = vmatpush2.msra.mxu0 0.0
  %784 = vmatprep.subr.mxu0 0.0
  %785 = vmatpush2.msra.mxu0 0.0
  %786 = vmatprep.subr.mxu0 0.0
  %787 = vmatpush2.msra.mxu0 0.0
  %788 = vmatprep.subr.mxu0 0.0
  %789 = vmatpush2.msra.mxu0 0.0
  %790 = vmatprep.subr.mxu0 0.0
  %791 = vmatpush2.msra.mxu0 0.0
  %792 = vmatprep.subr.mxu0 0.0
  %793 = vmatpush2.msra.mxu0 0.0
  %794 = vmatprep.subr.mxu0 0.0
  %795 = vmatpush2.msra.mxu0 0.0
  %796 = vmatprep.subr.mxu0 0.0
  %797 = vmatpush2.msra.mxu0 0.0
  %798 = vmatprep.subr.mxu0 0.0
  %799 = vmatpush2.msra.mxu0 0.0
  %800 = vmatprep.subr.mxu0 0.0
  %801 = vmatpush2.msra.mxu0 0.0
  %802 = vmatprep.mubr.f32.mxu0 0.0
  %803 = vmatmul.mubr.f32.gmra.mxu0 %v605
  %v804 = vpop.f32.mrf.mxu0
  %v805 = vadd.f32 0.0, %v804
  %v806 = vpop.f32.mrf.mxu0
  %807 = vmatprep.mubr.f32.mxu0 0.0
  %808 = vmatmul.mubr.f32.gmra.mxu0 %v608
  %v809 = vpop.f32.mrf.mxu0
  %v810 = vadd.f32 0.0, %v809
  %v811 = vpop.f32.mrf.mxu0
  %812 = vmatprep.mubr.f32.mxu0 0.0
  %813 = vmatmul.mubr.f32.gmra.mxu0 %v611
  %v814 = vpop.f32.mrf.mxu0
  %v815 = vadd.f32 0.0, %v814
  %v816 = vpop.f32.mrf.mxu0
  %817 = vmatprep.mubr.f32.mxu0 0.0
  %818 = vmatmul.mubr.f32.gmra.mxu0 %v614
  %v819 = vpop.f32.mrf.mxu0
  %v820 = vadd.f32 0.0, %v819
  %v821 = vpop.f32.mrf.mxu0
  %822 = vdwg.mxu0
  %v823 = vadd.f32 %v490, %v805
  %v824 = vadd.f32 %v496, %v810
  %v825 = vadd.f32 %v502, %v815
  %v826 = vadd.f32 %v508, %v820
  %v827 = vxor.u32 %v823, 2147483648
  %v828 = vxor.u32 %v824, 2147483648
  %v829 = vxor.u32 %v825, 2147483648
  %v830 = vxor.u32 %v826, 2147483648
  %v831 = vmul.f32 %v827, 1.442695
  %v832 = vpow.pop %v831
  %v833 = vmul.f32 %v828, 1.442695
  %v834 = vpow.pop %v833
  %v835 = vmul.f32 %v829, 1.442695
  %v836 = vpow.pop %v835
  %v837 = vmul.f32 %v830, 1.442695
  %v838 = vpow.pop %v837
  %v839 = vadd.f32 %v832, 1.0
  %v840 = vadd.f32 %v834, 1.0
  %v841 = vadd.f32 %v836, 1.0
  %v842 = vadd.f32 %v838, 1.0
  %v843 = vrcp.pop %v839
  %v844 = vmul.f32 1.0, %v843
  %v845 = vrcp.pop %v840
  %v846 = vmul.f32 1.0, %v845
  %v847 = vrcp.pop %v841
  %v848 = vmul.f32 1.0, %v847
  %v849 = vrcp.pop %v842
  %v850 = vmul.f32 1.0, %v849
  %v851 = vmul.f32 %v848, 2.0
  %v852 = vsub.f32 %v851, 1.0
  %v853 = vmul.f32 %v846, %v733
  %v854 = vmul.f32 %v844, %v852
  %v855 = vadd.f32 %v853, %v854
  %v856 = vtanh.pop %v855
  %v857 = vmul.f32 %v850, %v856
  %v858 = vtanh.pop %v857
  %859 = vst [vmem:[#allocation2 + $0x8] sm:$0xff] %v858
  %860 = vmatprep.subr.mxu0 0.0
  %861 = vmatpush1.msra.mxu0 0.0
  %862 = vmatprep.subr.mxu0 0.0
  %863 = vmatpush1.msra.mxu0 0.0
  %864 = vmatprep.subr.mxu0 0.0
  %865 = vmatpush1.msra.mxu0 0.0
  %866 = vmatprep.subr.mxu0 0.0
  %867 = vmatpush1.msra.mxu0 0.0
  %868 = vmatprep.subr.mxu0 0.0
  %869 = vmatpush1.msra.mxu0 0.0
  %870 = vmatprep.subr.mxu0 0.0
  %871 = vmatpush1.msra.mxu0 0.0
  %872 = vmatprep.subr.mxu0 0.0
  %873 = vmatpush1.msra.mxu0 0.0
  %874 = vmatprep.subr.mxu0 0.0
  %875 = vmatpush1.msra.mxu0 0.0
  %876 = vmatprep.subr.mxu0 0.0
  %877 = vmatpush1.msra.mxu0 0.0
  %878 = vmatprep.subr.mxu0 0.0
  %879 = vmatpush1.msra.mxu0 0.0
  %880 = vmatprep.subr.mxu0 0.0
  %881 = vmatpush1.msra.mxu0 0.0
  %882 = vmatprep.subr.mxu0 0.0
  %883 = vmatpush1.msra.mxu0 0.0
  %884 = vmatprep.subr.mxu0 0.0
  %885 = vmatpush1.msra.mxu0 0.0
  %886 = vmatprep.subr.mxu0 0.0
  %887 = vmatpush1.msra.mxu0 0.0
  %888 = vmatprep.subr.mxu0 0.0
  %889 = vmatpush1.msra.mxu0 0.0
  %890 = vmatprep.subr.mxu0 0.0
  %891 = vmatpush1.msra.mxu0 %v858
  %892 = vmatprep.subr.mxu0 0.0
  %893 = vmatpush2.msra.mxu0 0.0
  %894 = vmatprep.subr.mxu0 0.0
  %895 = vmatpush2.msra.mxu0 0.0
  %896 = vmatprep.subr.mxu0 0.0
  %897 = vmatpush2.msra.mxu0 0.0
  %898 = vmatprep.subr.mxu0 0.0
  %899 = vmatpush2.msra.mxu0 0.0
  %900 = vmatprep.subr.mxu0 0.0
  %901 = vmatpush2.msra.mxu0 0.0
  %902 = vmatprep.subr.mxu0 0.0
  %903 = vmatpush2.msra.mxu0 0.0
  %904 = vmatprep.subr.mxu0 0.0
  %905 = vmatpush2.msra.mxu0 0.0
  %906 = vmatprep.subr.mxu0 0.0
  %907 = vmatpush2.msra.mxu0 0.0
  %908 = vmatprep.subr.mxu0 0.0
  %909 = vmatpush2.msra.mxu0 0.0
  %910 = vmatprep.subr.mxu0 0.0
  %911 = vmatpush2.msra.mxu0 0.0
  %912 = vmatprep.subr.mxu0 0.0
  %913 = vmatpush2.msra.mxu0 0.0
  %914 = vmatprep.subr.mxu0 0.0
  %915 = vmatpush2.msra.mxu0 0.0
  %916 = vmatprep.subr.mxu0 0.0
  %917 = vmatpush2.msra.mxu0 0.0
  %918 = vmatprep.subr.mxu0 0.0
  %919 = vmatpush2.msra.mxu0 0.0
  %920 = vmatprep.subr.mxu0 0.0
  %921 = vmatpush2.msra.mxu0 0.0
  %922 = vmatprep.subr.mxu0 0.0
  %923 = vmatpush2.msra.mxu0 0.0
  %924 = vmatprep.mubr.f32.mxu0 0.0
  %925 = vmatmul.mubr.f32.gmra.mxu0 %v605
  %v926 = vpop.f32.mrf.mxu0
  %v927 = vadd.f32 0.0, %v926
  %v928 = vpop.f32.mrf.mxu0
  %929 = vmatprep.mubr.f32.mxu0 0.0
  %930 = vmatmul.mubr.f32.gmra.mxu0 %v608
  %v931 = vpop.f32.mrf.mxu0
  %v932 = vadd.f32 0.0, %v931
  %v933 = vpop.f32.mrf.mxu0
  %934 = vmatprep.mubr.f32.mxu0 0.0
  %935 = vmatmul.mubr.f32.gmra.mxu0 %v611
  %v936 = vpop.f32.mrf.mxu0
  %v937 = vadd.f32 0.0, %v936
  %v938 = vpop.f32.mrf.mxu0
  %939 = vmatprep.mubr.f32.mxu0 0.0
  %940 = vmatmul.mubr.f32.gmra.mxu0 %v614
  %v941 = vpop.f32.mrf.mxu0
  %v942 = vadd.f32 0.0, %v941
  %v943 = vpop.f32.mrf.mxu0
  %944 = vdwg.mxu0
  %v945 = vadd.f32 %v577, %v927
  %v946 = vadd.f32 %v583, %v932
  %v947 = vadd.f32 %v589, %v937
  %v948 = vadd.f32 %v595, %v942
  %v949 = vxor.u32 %v945, 2147483648
  %v950 = vxor.u32 %v946, 2147483648
  %v951 = vxor.u32 %v947, 2147483648
  %v952 = vxor.u32 %v948, 2147483648
  %v953 = vmul.f32 %v949, 1.442695
  %v954 = vpow.pop %v953
  %v955 = vmul.f32 %v950, 1.442695
  %v956 = vpow.pop %v955
  %v957 = vmul.f32 %v951, 1.442695
  %v958 = vpow.pop %v957
  %v959 = vmul.f32 %v952, 1.442695
  %v960 = vpow.pop %v959
  %v961 = vadd.f32 %v954, 1.0
  %v962 = vadd.f32 %v956, 1.0
  %v963 = vadd.f32 %v958, 1.0
  %v964 = vadd.f32 %v960, 1.0
  %v965 = vrcp.pop %v961
  %v966 = vmul.f32 1.0, %v965
  %v967 = vrcp.pop %v962
  %v968 = vmul.f32 1.0, %v967
  %v969 = vrcp.pop %v963
  %v970 = vmul.f32 1.0, %v969
  %v971 = vrcp.pop %v964
  %v972 = vmul.f32 1.0, %v971
  %v973 = vmul.f32 %v970, 2.0
  %v974 = vsub.f32 %v973, 1.0
  %v975 = vmul.f32 %v968, %v855
  %v976 = vmul.f32 %v966, %v974
  %v977 = vadd.f32 %v975, %v976
  %v978 = vtanh.pop %v977
  %v979 = vmul.f32 %v972, %v978
  %v980 = vtanh.pop %v979
  %981 = vst [vmem:[#allocation2 + $0x10] sm:$0xff] %v980
  %982 = vmatprep.subr.mxu0 0.0
  %983 = vmatpush1.msra.mxu0 0.0
  %984 = vmatprep.subr.mxu0 0.0
  %985 = vmatpush1.msra.mxu0 0.0
  %986 = vmatprep.subr.mxu0 0.0
  %987 = vmatpush1.msra.mxu0 0.0
  %988 = vmatprep.subr.mxu0 0.0
  %989 = vmatpush1.msra.mxu0 0.0
  %990 = vmatprep.subr.mxu0 0.0
  %991 = vmatpush1.msra.mxu0 0.0
  %992 = vmatprep.subr.mxu0 0.0
  %993 = vmatpush1.msra.mxu0 0.0
  %994 = vmatprep.subr.mxu0 0.0
  %995 = vmatpush1.msra.mxu0 0.0
  %996 = vmatprep.subr.mxu0 0.0
  %997 = vmatpush1.msra.mxu0 0.0
  %998 = vmatprep.subr.mxu0 0.0
  %999 = vmatpush1.msra.mxu0 0.0
  %1000 = vmatprep.subr.mxu0 0.0
  %1001 = vmatpush1.msra.mxu0 0.0
  %1002 = vmatprep.subr.mxu0 0.0
  %1003 = vmatpush1.msra.mxu0 0.0
  %1004 = vmatprep.subr.mxu0 0.0
  %1005 = vmatpush1.msra.mxu0 0.0
  %1006 = vmatprep.subr.mxu0 0.0
  %1007 = vmatpush1.msra.mxu0 0.0
  %1008 = vmatprep.subr.mxu0 0.0
  %1009 = vmatpush1.msra.mxu0 0.0
  %1010 = vmatprep.subr.mxu0 0.0
  %1011 = vmatpush1.msra.mxu0 0.0
  %1012 = vmatprep.subr.mxu0 0.0
  %1013 = vmatpush1.msra.mxu0 %v980
  %1014 = vmatprep.subr.mxu0 0.0
  %1015 = vmatpush2.msra.mxu0 0.0
  %1016 = vmatprep.subr.mxu0 0.0
  %1017 = vmatpush2.msra.mxu0 0.0
  %1018 = vmatprep.subr.mxu0 0.0
  %1019 = vmatpush2.msra.mxu0 0.0
  %1020 = vmatprep.subr.mxu0 0.0
  %1021 = vmatpush2.msra.mxu0 0.0
  %1022 = vmatprep.subr.mxu0 0.0
  %1023 = vmatpush2.msra.mxu0 0.0
  %1024 = vmatprep.subr.mxu0 0.0
  %1025 = vmatpush2.msra.mxu0 0.0
  %1026 = vmatprep.subr.mxu0 0.0
  %1027 = vmatpush2.msra.mxu0 0.0
  %1028 = vmatprep.subr.mxu0 0.0
  %1029 = vmatpush2.msra.mxu0 0.0
  %1030 = vmatprep.subr.mxu0 0.0
  %1031 = vmatpush2.msra.mxu0 0.0
  %1032 = vmatprep.subr.mxu0 0.0
  %1033 = vmatpush2.msra.mxu0 0.0
  %1034 = vmatprep.subr.mxu0 0.0
  %1035 = vmatpush2.msra.mxu0 0.0
  %1036 = vmatprep.subr.mxu0 0.0
  %1037 = vmatpush2.msra.mxu0 0.0
  %1038 = vmatprep.subr.mxu0 0.0
  %1039 = vmatpush2.msra.mxu0 0.0
  %1040 = vmatprep.subr.mxu0 0.0
  %1041 = vmatpush2.msra.mxu0 0.0
  %1042 = vmatprep.subr.mxu0 0.0
  %1043 = vmatpush2.msra.mxu0 0.0
  %1044 = vmatprep.subr.mxu0 0.0
  %1045 = vmatpush2.msra.mxu0 0.0
  %1046 = vmatprep.mubr.f32.mxu0 0.0
  %1047 = vmatmul.mubr.f32.gmra.mxu0 %v605
  %v1048 = vpop.f32.mrf.mxu0
  %v1049 = vadd.f32 0.0, %v1048
  %v1050 = vpop.f32.mrf.mxu0
  %1051 = vmatprep.mubr.f32.mxu0 0.0
  %1052 = vmatmul.mubr.f32.gmra.mxu0 %v608
  %v1053 = vpop.f32.mrf.mxu0
  %v1054 = vadd.f32 0.0, %v1053
  %v1055 = vpop.f32.mrf.mxu0
  %1056 = vmatprep.mubr.f32.mxu0 0.0
  %1057 = vmatmul.mubr.f32.gmra.mxu0 %v611
  %v1058 = vpop.f32.mrf.mxu0
  %v1059 = vadd.f32 0.0, %v1058
  %v1060 = vpop.f32.mrf.mxu0
  %1061 = vmatprep.mubr.f32.mxu0 0.0
  %1062 = vmatmul.mubr.f32.gmra.mxu0 %v614
  %v1063 = vpop.f32.mrf.mxu0
  %v1064 = vadd.f32 0.0, %v1063
  %v1065 = vpop.f32.mrf.mxu0
  %1066 = vdwg.mxu0
  %v1067 = vadd.f32 %v579, %v1049
  %v1068 = vadd.f32 %v585, %v1054
  %v1069 = vadd.f32 %v591, %v1059
  %v1070 = vadd.f32 %v597, %v1064
  %v1071 = vxor.u32 %v1067, 2147483648
  %v1072 = vxor.u32 %v1068, 2147483648
  %v1073 = vxor.u32 %v1069, 2147483648
  %v1074 = vxor.u32 %v1070, 2147483648
  %v1075 = vmul.f32 %v1071, 1.442695
  %v1076 = vpow.pop %v1075
  %v1077 = vmul.f32 %v1072, 1.442695
  %v1078 = vpow.pop %v1077
  %v1079 = vmul.f32 %v1073, 1.442695
  %v1080 = vpow.pop %v1079
  %v1081 = vmul.f32 %v1074, 1.442695
  %v1082 = vpow.pop %v1081
  %v1083 = vadd.f32 %v1076, 1.0
  %v1084 = vadd.f32 %v1078, 1.0
  %v1085 = vadd.f32 %v1080, 1.0
  %v1086 = vadd.f32 %v1082, 1.0
  %v1087 = vrcp.pop %v1083
  %v1088 = vmul.f32 1.0, %v1087
  %v1089 = vrcp.pop %v1084
  %v1090 = vmul.f32 1.0, %v1089
  %v1091 = vrcp.pop %v1085
  %v1092 = vmul.f32 1.0, %v1091
  %v1093 = vrcp.pop %v1086
  %v1094 = vmul.f32 1.0, %v1093
  %v1095 = vmul.f32 %v1092, 2.0
  %v1096 = vsub.f32 %v1095, 1.0
  %v1097 = vmul.f32 %v1090, %v977
  %v1098 = vmul.f32 %v1088, %v1096
  %v1099 = vadd.f32 %v1097, %v1098
  %v1100 = vtanh.pop %v1099
  %v1101 = vmul.f32 %v1094, %v1100
  %v1102 = vtanh.pop %v1101
  %1103 = vst [vmem:[#allocation2 + $0x18] sm:$0xff] %v1102
  %s1104 = smul.u32 3, 384
  %s1105 = smul.u32 %s1104, 1
  %s1106 = sshll.u32 %s1105, 4
  %1107 = dma.done [#allocation4], %s1106
  %v1108 = vld [vmem:[%s8] sm:$0xff]
  %v1109 = vld [vmem:[%s8 + $0x8] sm:$0xff]
  %v1110 = vld [vmem:[%s8 + $0x10] sm:$0xff]
  %v1111 = vld [vmem:[%s8 + $0x18] sm:$0xff]
  %v1112 = vld [vmem:[%s5] sm:$0x7]
  %v1113 = vld [vmem:[#allocation2] sm:$0xff]
  %v1114 = vld [vmem:[#allocation2 + $0x8] sm:$0xff]
  %v1115 = vld [vmem:[#allocation2 + $0x10] sm:$0xff]
  %v1116 = vld [vmem:[#allocation2 + $0x18] sm:$0xff]
  %v1117 = vld [vmem:[#allocation3] sm:$0xff]
  %v1118 = vld [vmem:[#allocation3 + $0x8] sm:$0xff]
  %v1119 = vld [vmem:[#allocation3 + $0x10] sm:$0xff]
  %v1120 = vld [vmem:[#allocation3 + $0x18] sm:$0xff]
  %v1121 = vld [vmem:[#allocation3 + $0x20] sm:$0xff]
  %v1122 = vld [vmem:[#allocation3 + $0x28] sm:$0xff]
  %v1123 = vld [vmem:[#allocation3 + $0x30] sm:$0xff]
  %v1124 = vld [vmem:[#allocation3 + $0x38] sm:$0xff]
  %v1125 = vld [vmem:[#allocation3 + $0x40] sm:$0xff]
  %v1126 = vld [vmem:[#allocation3 + $0x48] sm:$0xff]
  %v1127 = vld [vmem:[#allocation3 + $0x50] sm:$0xff]
  %v1128 = vld [vmem:[#allocation3 + $0x58] sm:$0xff]
  %v1129 = vld [vmem:[#allocation3 + $0x60] sm:$0xff]
  %v1130 = vld [vmem:[#allocation3 + $0x68] sm:$0xff]
  %v1131 = vld [vmem:[#allocation3 + $0x70] sm:$0xff]
  %v1132 = vld [vmem:[#allocation3 + $0x78] sm:$0xff]
  %v1133 = vld [vmem:[#allocation3 + $0x80] sm:$0xff]
  %v1134 = vld [vmem:[#allocation3 + $0x88] sm:$0xff]
  %v1135 = vld [vmem:[#allocation3 + $0x90] sm:$0xff]
  %v1136 = vld [vmem:[#allocation3 + $0x98] sm:$0xff]
  %v1137 = vld [vmem:[#allocation3 + $0xa0] sm:$0xff]
  %v1138 = vld [vmem:[#allocation3 + $0xa8] sm:$0xff]
  %v1139 = vld [vmem:[#allocation3 + $0xb0] sm:$0xff]
  %v1140 = vld [vmem:[#allocation3 + $0xb8] sm:$0xff]
  %v1141 = vld [vmem:[#allocation3 + $0xc0] sm:$0xff]
  %v1142 = vld [vmem:[#allocation3 + $0xc8] sm:$0xff]
  %v1143 = vld [vmem:[#allocation3 + $0xd0] sm:$0xff]
  %v1144 = vld [vmem:[#allocation3 + $0xd8] sm:$0xff]
  %v1145 = vld [vmem:[#allocation3 + $0xe0] sm:$0xff]
  %v1146 = vld [vmem:[#allocation3 + $0xe8] sm:$0xff]
  %v1147 = vld [vmem:[#allocation3 + $0xf0] sm:$0xff]
  %v1148 = vld [vmem:[#allocation3 + $0xf8] sm:$0xff]
  %v1149 = vld [vmem:[#allocation3 + $0x100] sm:$0xff]
  %v1150 = vld [vmem:[#allocation3 + $0x108] sm:$0xff]
  %v1151 = vld [vmem:[#allocation3 + $0x110] sm:$0xff]
  %v1152 = vld [vmem:[#allocation3 + $0x118] sm:$0xff]
  %v1153 = vld [vmem:[#allocation3 + $0x120] sm:$0xff]
  %v1154 = vld [vmem:[#allocation3 + $0x128] sm:$0xff]
  %v1155 = vld [vmem:[#allocation3 + $0x130] sm:$0xff]
  %v1156 = vld [vmem:[#allocation3 + $0x138] sm:$0xff]
  %v1157 = vld [vmem:[#allocation3 + $0x140] sm:$0xff]
  %v1158 = vld [vmem:[#allocation3 + $0x148] sm:$0xff]
  %v1159 = vld [vmem:[#allocation3 + $0x150] sm:$0xff]
  %v1160 = vld [vmem:[#allocation3 + $0x158] sm:$0xff]
  %v1161 = vld [vmem:[#allocation3 + $0x160] sm:$0xff]
  %v1162 = vld [vmem:[#allocation3 + $0x168] sm:$0xff]
  %v1163 = vld [vmem:[#allocation3 + $0x170] sm:$0xff]
  %v1164 = vld [vmem:[#allocation3 + $0x178] sm:$0xff]
  %v1166 = vrot.slane %v1116, 7
  %vm1171 = vcmask 1040384
  %v1172 = vrot.slane %v1113, 7
  %v1173 = vrot.slane %v1114, 7
  %v1174 = vsel %vm1171, %v1172, %v1173
  %v1175 = vrot.slane %v1115, 7
  %v1176 = vsel %vm1171, %v1173, %v1175
  %v1177 = vsel %vm1171, %v1175, %v1166
  %v1182 = vsel %vm1171, %v1166, %v1172
  %vm1183 = vcmask 1046528
  %v1184 = vrot.slane %v1113, 1
  %v1185 = vrot.slane %v1114, 1
  %v1186 = vsel %vm1183, %v1184, %v1185
  %v1187 = vrot.slane %v1115, 1
  %v1188 = vsel %vm1183, %v1185, %v1187
  %v1189 = vrot.slane %v1116, 1
  %v1190 = vsel %vm1183, %v1187, %v1189
  %v1196 = vsel %vm1183, %v1189, %v1184
  %v1197 = vlaneseq
  %v1198 = vshrl.u32 %v1197, 7
  %v1199 = vsub.s32 0, %v1198
  %v1200 = vrot.slane %v1112, %v1199
  %1201 = vmatprep.subr.mxu0 0.0
  %1202 = vmatpush1.msra.mxu0 %v1132
  %1203 = vmatprep.subr.mxu0 0.0
  %1204 = vmatpush1.msra.mxu0 %v1131
  %1205 = vmatprep.subr.mxu0 0.0
  %1206 = vmatpush1.msra.mxu0 %v1130
  %1207 = vmatprep.subr.mxu0 0.0
  %1208 = vmatpush1.msra.mxu0 %v1129
  %1209 = vmatprep.subr.mxu0 0.0
  %1210 = vmatpush1.msra.mxu0 %v1128
  %1211 = vmatprep.subr.mxu0 0.0
  %1212 = vmatpush1.msra.mxu0 %v1127
  %1213 = vmatprep.subr.mxu0 0.0
  %1214 = vmatpush1.msra.mxu0 %v1126
  %1215 = vmatprep.subr.mxu0 0.0
  %1216 = vmatpush1.msra.mxu0 %v1125
  %1217 = vmatprep.subr.mxu0 0.0
  %1218 = vmatpush1.msra.mxu0 %v1124
  %1219 = vmatprep.subr.mxu0 0.0
  %1220 = vmatpush1.msra.mxu0 %v1123
  %1221 = vmatprep.subr.mxu0 0.0
  %1222 = vmatpush1.msra.mxu0 %v1122
  %1223 = vmatprep.subr.mxu0 0.0
  %1224 = vmatpush1.msra.mxu0 %v1121
  %1225 = vmatprep.subr.mxu0 0.0
  %1226 = vmatpush1.msra.mxu0 %v1120
  %1227 = vmatprep.subr.mxu0 0.0
  %1228 = vmatpush1.msra.mxu0 %v1119
  %1229 = vmatprep.subr.mxu0 0.0
  %1230 = vmatpush1.msra.mxu0 %v1118
  %1231 = vmatprep.subr.mxu0 0.0
  %1232 = vmatpush1.msra.mxu0 %v1117
  %1233 = vmatprep.subr.mxu0 0.0
  %1234 = vmatpush2.msra.mxu0 %v1148
  %1235 = vmatprep.subr.mxu0 0.0
  %1236 = vmatpush2.msra.mxu0 %v1147
  %1237 = vmatprep.subr.mxu0 0.0
  %1238 = vmatpush2.msra.mxu0 %v1146
  %1239 = vmatprep.subr.mxu0 0.0
  %1240 = vmatpush2.msra.mxu0 %v1145
  %1241 = vmatprep.subr.mxu0 0.0
  %1242 = vmatpush2.msra.mxu0 %v1144
  %1243 = vmatprep.subr.mxu0 0.0
  %1244 = vmatpush2.msra.mxu0 %v1143
  %1245 = vmatprep.subr.mxu0 0.0
  %1246 = vmatpush2.msra.mxu0 %v1142
  %1247 = vmatprep.subr.mxu0 0.0
  %1248 = vmatpush2.msra.mxu0 %v1141
  %1249 = vmatprep.subr.mxu0 0.0
  %1250 = vmatpush2.msra.mxu0 %v1140
  %1251 = vmatprep.subr.mxu0 0.0
  %1252 = vmatpush2.msra.mxu0 %v1139
  %1253 = vmatprep.subr.mxu0 0.0
  %1254 = vmatpush2.msra.mxu0 %v1138
  %1255 = vmatprep.subr.mxu0 0.0
  %1256 = vmatpush2.msra.mxu0 %v1137
  %1257 = vmatprep.subr.mxu0 0.0
  %1258 = vmatpush2.msra.mxu0 %v1136
  %1259 = vmatprep.subr.mxu0 0.0
  %1260 = vmatpush2.msra.mxu0 %v1135
  %1261 = vmatprep.subr.mxu0 0.0
  %1262 = vmatpush2.msra.mxu0 %v1134
  %1263 = vmatprep.subr.mxu0 0.0
  %1264 = vmatpush2.msra.mxu0 %v1133
  %1265 = vmatprep.mubr.f32.mxu0 %v1113
  %1266 = vmatmul.mubr.f32.gmra.mxu0 %v1182
  %v1267 = vpop.f32.mrf.mxu0
  %v1268 = vadd.f32 %v1200, %v1267
  %v1269 = vpop.f32.mrf.mxu0
  %1270 = vmatprep.mubr.f32.mxu0 %v1114
  %1271 = vmatmul.mubr.f32.gmra.mxu0 %v1174
  %v1272 = vpop.f32.mrf.mxu0
  %v1273 = vadd.f32 %v1200, %v1272
  %v1274 = vpop.f32.mrf.mxu0
  %1275 = vmatprep.mubr.f32.mxu0 %v1115
  %1276 = vmatmul.mubr.f32.gmra.mxu0 %v1176
  %v1277 = vpop.f32.mrf.mxu0
  %v1278 = vadd.f32 %v1200, %v1277
  %v1279 = vpop.f32.mrf.mxu0
  %1280 = vmatprep.mubr.f32.mxu0 %v1116
  %1281 = vmatmul.mubr.f32.gmra.mxu0 %v1177
  %v1282 = vpop.f32.mrf.mxu0
  %v1283 = vadd.f32 %v1200, %v1282
  %v1284 = vpop.f32.mrf.mxu0
  %1285 = vdwg.mxu0
  %1286 = vmatprep.subr.mxu0 0.0
  %1287 = vmatpush1.msra.mxu0 %v1164
  %1288 = vmatprep.subr.mxu0 0.0
  %1289 = vmatpush1.msra.mxu0 %v1163
  %1290 = vmatprep.subr.mxu0 0.0
  %1291 = vmatpush1.msra.mxu0 %v1162
  %1292 = vmatprep.subr.mxu0 0.0
  %1293 = vmatpush1.msra.mxu0 %v1161
  %1294 = vmatprep.subr.mxu0 0.0
  %1295 = vmatpush1.msra.mxu0 %v1160
  %1296 = vmatprep.subr.mxu0 0.0
  %1297 = vmatpush1.msra.mxu0 %v1159
  %1298 = vmatprep.subr.mxu0 0.0
  %1299 = vmatpush1.msra.mxu0 %v1158
  %1300 = vmatprep.subr.mxu0 0.0
  %1301 = vmatpush1.msra.mxu0 %v1157
  %1302 = vmatprep.subr.mxu0 0.0
  %1303 = vmatpush1.msra.mxu0 %v1156
  %1304 = vmatprep.subr.mxu0 0.0
  %1305 = vmatpush1.msra.mxu0 %v1155
  %1306 = vmatprep.subr.mxu0 0.0
  %1307 = vmatpush1.msra.mxu0 %v1154
  %1308 = vmatprep.subr.mxu0 0.0
  %1309 = vmatpush1.msra.mxu0 %v1153
  %1310 = vmatprep.subr.mxu0 0.0
  %1311 = vmatpush1.msra.mxu0 %v1152
  %1312 = vmatprep.subr.mxu0 0.0
  %1313 = vmatpush1.msra.mxu0 %v1151
  %1314 = vmatprep.subr.mxu0 0.0
  %1315 = vmatpush1.msra.mxu0 %v1150
  %1316 = vmatprep.subr.mxu0 0.0
  %1317 = vmatpush1.msra.mxu0 %v1149
  %1318 = vmatprep.subr.mxu0 0.0
  %1319 = vmatpush2.msra.mxu0 0.0
  %1320 = vmatprep.subr.mxu0 0.0
  %1321 = vmatpush2.msra.mxu0 0.0
  %1322 = vmatprep.subr.mxu0 0.0
  %1323 = vmatpush2.msra.mxu0 0.0
  %1324 = vmatprep.subr.mxu0 0.0
  %1325 = vmatpush2.msra.mxu0 0.0
  %1326 = vmatprep.subr.mxu0 0.0
  %1327 = vmatpush2.msra.mxu0 0.0
  %1328 = vmatprep.subr.mxu0 0.0
  %1329 = vmatpush2.msra.mxu0 0.0
  %1330 = vmatprep.subr.mxu0 0.0
  %1331 = vmatpush2.msra.mxu0 0.0
  %1332 = vmatprep.subr.mxu0 0.0
  %1333 = vmatpush2.msra.mxu0 0.0
  %1334 = vmatprep.subr.mxu0 0.0
  %1335 = vmatpush2.msra.mxu0 0.0
  %1336 = vmatprep.subr.mxu0 0.0
  %1337 = vmatpush2.msra.mxu0 0.0
  %1338 = vmatprep.subr.mxu0 0.0
  %1339 = vmatpush2.msra.mxu0 0.0
  %1340 = vmatprep.subr.mxu0 0.0
  %1341 = vmatpush2.msra.mxu0 0.0
  %1342 = vmatprep.subr.mxu0 0.0
  %1343 = vmatpush2.msra.mxu0 0.0
  %1344 = vmatprep.subr.mxu0 0.0
  %1345 = vmatpush2.msra.mxu0 0.0
  %1346 = vmatprep.subr.mxu0 0.0
  %1347 = vmatpush2.msra.mxu0 0.0
  %1348 = vmatprep.subr.mxu0 0.0
  %1349 = vmatpush2.msra.mxu0 0.0
  %1350 = vmatprep.mubr.f32.mxu0 0.0
  %1351 = vmatmul.mubr.f32.gmra.mxu0 %v1186
  %v1352 = vpop.f32.mrf.mxu0
  %v1353 = vadd.f32 %v1268, %v1352
  %v1354 = vpop.f32.mrf.mxu0
  %1355 = vmatprep.mubr.f32.mxu0 0.0
  %1356 = vmatmul.mubr.f32.gmra.mxu0 %v1188
  %v1357 = vpop.f32.mrf.mxu0
  %v1358 = vadd.f32 %v1273, %v1357
  %v1359 = vpop.f32.mrf.mxu0
  %1360 = vmatprep.mubr.f32.mxu0 0.0
  %1361 = vmatmul.mubr.f32.gmra.mxu0 %v1190
  %v1362 = vpop.f32.mrf.mxu0
  %v1363 = vadd.f32 %v1278, %v1362
  %v1364 = vpop.f32.mrf.mxu0
  %1365 = vmatprep.mubr.f32.mxu0 0.0
  %1366 = vmatmul.mubr.f32.gmra.mxu0 %v1196
  %v1367 = vpop.f32.mrf.mxu0
  %v1368 = vadd.f32 %v1283, %v1367
  %v1369 = vpop.f32.mrf.mxu0
  %1370 = vdwg.mxu0
  %v1371 = vmax.f32 %v1353, 0.0
  %v1372 = vmax.f32 %v1358, 0.0
  %v1373 = vmax.f32 %v1363, 0.0
  %v1374 = vmax.f32 %v1368, 0.0
  %1376 = vset.pattern.permute.xlu0 0
  %1377 = vperm.xlu0 %1376, %v1108
  %v1378 = vpop.permute.xlu0 %1377
  %1381 = vset.pattern.permute.xlu0 0
  %1382 = vperm.xlu0 %1381, %v1109
  %v1383 = vpop.permute.xlu0 %1382
  %1386 = vset.pattern.permute.xlu0 0
  %1387 = vperm.xlu0 %1386, %v1110
  %v1388 = vpop.permute.xlu0 %1387
  %1391 = vset.pattern.permute.xlu0 0
  %1392 = vperm.xlu0 %1391, %v1111
  %v1393 = vpop.permute.xlu0 %1392
  %v1395 = vmul.f32 %v1371, %v1378
  %v1396 = vmul.f32 %v1372, %v1383
  %v1397 = vmul.f32 %v1373, %v1388
  %v1398 = vmul.f32 %v1374, %v1393
  %s1399 = scalar_lea.vmem [#allocation3], 384
  %v1400 = vld [vmem:[%s1399] sm:$0xff]
  %v1401 = vld [vmem:[%s1399 + $0x8] sm:$0xff]
  %v1402 = vld [vmem:[%s1399 + $0x10] sm:$0xff]
  %v1403 = vld [vmem:[%s1399 + $0x18] sm:$0xff]
  %v1404 = vld [vmem:[%s1399 + $0x20] sm:$0xff]
  %v1405 = vld [vmem:[%s1399 + $0x28] sm:$0xff]
  %v1406 = vld [vmem:[%s1399 + $0x30] sm:$0xff]
  %v1407 = vld [vmem:[%s1399 + $0x38] sm:$0xff]
  %v1408 = vld [vmem:[%s1399 + $0x40] sm:$0xff]
  %v1409 = vld [vmem:[%s1399 + $0x48] sm:$0xff]
  %v1410 = vld [vmem:[%s1399 + $0x50] sm:$0xff]
  %v1411 = vld [vmem:[%s1399 + $0x58] sm:$0xff]
  %v1412 = vld [vmem:[%s1399 + $0x60] sm:$0xff]
  %v1413 = vld [vmem:[%s1399 + $0x68] sm:$0xff]
  %v1414 = vld [vmem:[%s1399 + $0x70] sm:$0xff]
  %v1415 = vld [vmem:[%s1399 + $0x78] sm:$0xff]
  %v1416 = vld [vmem:[%s1399 + $0x80] sm:$0xff]
  %v1417 = vld [vmem:[%s1399 + $0x88] sm:$0xff]
  %v1418 = vld [vmem:[%s1399 + $0x90] sm:$0xff]
  %v1419 = vld [vmem:[%s1399 + $0x98] sm:$0xff]
  %v1420 = vld [vmem:[%s1399 + $0xa0] sm:$0xff]
  %v1421 = vld [vmem:[%s1399 + $0xa8] sm:$0xff]
  %v1422 = vld [vmem:[%s1399 + $0xb0] sm:$0xff]
  %v1423 = vld [vmem:[%s1399 + $0xb8] sm:$0xff]
  %v1424 = vld [vmem:[%s1399 + $0xc0] sm:$0xff]
  %v1425 = vld [vmem:[%s1399 + $0xc8] sm:$0xff]
  %v1426 = vld [vmem:[%s1399 + $0xd0] sm:$0xff]
  %v1427 = vld [vmem:[%s1399 + $0xd8] sm:$0xff]
  %v1428 = vld [vmem:[%s1399 + $0xe0] sm:$0xff]
  %v1429 = vld [vmem:[%s1399 + $0xe8] sm:$0xff]
  %v1430 = vld [vmem:[%s1399 + $0xf0] sm:$0xff]
  %v1431 = vld [vmem:[%s1399 + $0xf8] sm:$0xff]
  %v1432 = vld [vmem:[%s1399 + $0x100] sm:$0xff]
  %v1433 = vld [vmem:[%s1399 + $0x108] sm:$0xff]
  %v1434 = vld [vmem:[%s1399 + $0x110] sm:$0xff]
  %v1435 = vld [vmem:[%s1399 + $0x118] sm:$0xff]
  %v1436 = vld [vmem:[%s1399 + $0x120] sm:$0xff]
  %v1437 = vld [vmem:[%s1399 + $0x128] sm:$0xff]
  %v1438 = vld [vmem:[%s1399 + $0x130] sm:$0xff]
  %v1439 = vld [vmem:[%s1399 + $0x138] sm:$0xff]
  %v1440 = vld [vmem:[%s1399 + $0x140] sm:$0xff]
  %v1441 = vld [vmem:[%s1399 + $0x148] sm:$0xff]
  %v1442 = vld [vmem:[%s1399 + $0x150] sm:$0xff]
  %v1443 = vld [vmem:[%s1399 + $0x158] sm:$0xff]
  %v1444 = vld [vmem:[%s1399 + $0x160] sm:$0xff]
  %v1445 = vld [vmem:[%s1399 + $0x168] sm:$0xff]
  %v1446 = vld [vmem:[%s1399 + $0x170] sm:$0xff]
  %v1447 = vld [vmem:[%s1399 + $0x178] sm:$0xff]
  %v1449 = vrot.slane %v1398, 7
  %v1454 = vrot.slane %v1395, 7
  %v1455 = vrot.slane %v1396, 7
  %v1456 = vsel %vm1171, %v1454, %v1455
  %v1457 = vrot.slane %v1397, 7
  %v1458 = vsel %vm1171, %v1455, %v1457
  %v1459 = vsel %vm1171, %v1457, %v1449
  %v1464 = vsel %vm1171, %v1449, %v1454
  %v1465 = vrot.slane %v1395, 1
  %v1466 = vrot.slane %v1396, 1
  %v1467 = vsel %vm1183, %v1465, %v1466
  %v1468 = vrot.slane %v1397, 1
  %v1469 = vsel %vm1183, %v1466, %v1468
  %v1470 = vrot.slane %v1398, 1
  %v1471 = vsel %vm1183, %v1468, %v1470
  %v1477 = vsel %vm1183, %v1470, %v1465
  %v1478 = vlaneseq
  %v1479 = vshrl.u32 %v1478, 7
  %v1480 = vsub.s32 1, %v1479
  %v1481 = vrot.slane %v1112, %v1480
  %1482 = vmatprep.subr.mxu0 0.0
  %1483 = vmatpush1.msra.mxu0 %v1415
  %1484 = vmatprep.subr.mxu0 0.0
  %1485 = vmatpush1.msra.mxu0 %v1414
  %1486 = vmatprep.subr.mxu0 0.0
  %1487 = vmatpush1.msra.mxu0 %v1413
  %1488 = vmatprep.subr.mxu0 0.0
  %1489 = vmatpush1.msra.mxu0 %v1412
  %1490 = vmatprep.subr.mxu0 0.0
  %1491 = vmatpush1.msra.mxu0 %v1411
  %1492 = vmatprep.subr.mxu0 0.0
  %1493 = vmatpush1.msra.mxu0 %v1410
  %1494 = vmatprep.subr.mxu0 0.0
  %1495 = vmatpush1.msra.mxu0 %v1409
  %1496 = vmatprep.subr.mxu0 0.0
  %1497 = vmatpush1.msra.mxu0 %v1408
  %1498 = vmatprep.subr.mxu0 0.0
  %1499 = vmatpush1.msra.mxu0 %v1407
  %1500 = vmatprep.subr.mxu0 0.0
  %1501 = vmatpush1.msra.mxu0 %v1406
  %1502 = vmatprep.subr.mxu0 0.0
  %1503 = vmatpush1.msra.mxu0 %v1405
  %1504 = vmatprep.subr.mxu0 0.0
  %1505 = vmatpush1.msra.mxu0 %v1404
  %1506 = vmatprep.subr.mxu0 0.0
  %1507 = vmatpush1.msra.mxu0 %v1403
  %1508 = vmatprep.subr.mxu0 0.0
  %1509 = vmatpush1.msra.mxu0 %v1402
  %1510 = vmatprep.subr.mxu0 0.0
  %1511 = vmatpush1.msra.mxu0 %v1401
  %1512 = vmatprep.subr.mxu0 0.0
  %1513 = vmatpush1.msra.mxu0 %v1400
  %1514 = vmatprep.subr.mxu0 0.0
  %1515 = vmatpush2.msra.mxu0 %v1431
  %1516 = vmatprep.subr.mxu0 0.0
  %1517 = vmatpush2.msra.mxu0 %v1430
  %1518 = vmatprep.subr.mxu0 0.0
  %1519 = vmatpush2.msra.mxu0 %v1429
  %1520 = vmatprep.subr.mxu0 0.0
  %1521 = vmatpush2.msra.mxu0 %v1428
  %1522 = vmatprep.subr.mxu0 0.0
  %1523 = vmatpush2.msra.mxu0 %v1427
  %1524 = vmatprep.subr.mxu0 0.0
  %1525 = vmatpush2.msra.mxu0 %v1426
  %1526 = vmatprep.subr.mxu0 0.0
  %1527 = vmatpush2.msra.mxu0 %v1425
  %1528 = vmatprep.subr.mxu0 0.0
  %1529 = vmatpush2.msra.mxu0 %v1424
  %1530 = vmatprep.subr.mxu0 0.0
  %1531 = vmatpush2.msra.mxu0 %v1423
  %1532 = vmatprep.subr.mxu0 0.0
  %1533 = vmatpush2.msra.mxu0 %v1422
  %1534 = vmatprep.subr.mxu0 0.0
  %1535 = vmatpush2.msra.mxu0 %v1421
  %1536 = vmatprep.subr.mxu0 0.0
  %1537 = vmatpush2.msra.mxu0 %v1420
  %1538 = vmatprep.subr.mxu0 0.0
  %1539 = vmatpush2.msra.mxu0 %v1419
  %1540 = vmatprep.subr.mxu0 0.0
  %1541 = vmatpush2.msra.mxu0 %v1418
  %1542 = vmatprep.subr.mxu0 0.0
  %1543 = vmatpush2.msra.mxu0 %v1417
  %1544 = vmatprep.subr.mxu0 0.0
  %1545 = vmatpush2.msra.mxu0 %v1416
  %1546 = vmatprep.mubr.f32.mxu0 %v1395
  %1547 = vmatmul.mubr.f32.gmra.mxu0 %v1464
  %v1548 = vpop.f32.mrf.mxu0
  %v1549 = vadd.f32 %v1481, %v1548
  %v1550 = vpop.f32.mrf.mxu0
  %1551 = vmatprep.mubr.f32.mxu0 %v1396
  %1552 = vmatmul.mubr.f32.gmra.mxu0 %v1456
  %v1553 = vpop.f32.mrf.mxu0
  %v1554 = vadd.f32 %v1481, %v1553
  %v1555 = vpop.f32.mrf.mxu0
  %1556 = vmatprep.mubr.f32.mxu0 %v1397
  %1557 = vmatmul.mubr.f32.gmra.mxu0 %v1458
  %v1558 = vpop.f32.mrf.mxu0
  %v1559 = vadd.f32 %v1481, %v1558
  %v1560 = vpop.f32.mrf.mxu0
  %1561 = vmatprep.mubr.f32.mxu0 %v1398
  %1562 = vmatmul.mubr.f32.gmra.mxu0 %v1459
  %v1563 = vpop.f32.mrf.mxu0
  %v1564 = vadd.f32 %v1481, %v1563
  %v1565 = vpop.f32.mrf.mxu0
  %1566 = vdwg.mxu0
  %1567 = vmatprep.subr.mxu0 0.0
  %1568 = vmatpush1.msra.mxu0 %v1447
  %1569 = vmatprep.subr.mxu0 0.0
  %1570 = vmatpush1.msra.mxu0 %v1446
  %1571 = vmatprep.subr.mxu0 0.0
  %1572 = vmatpush1.msra.mxu0 %v1445
  %1573 = vmatprep.subr.mxu0 0.0
  %1574 = vmatpush1.msra.mxu0 %v1444
  %1575 = vmatprep.subr.mxu0 0.0
  %1576 = vmatpush1.msra.mxu0 %v1443
  %1577 = vmatprep.subr.mxu0 0.0
  %1578 = vmatpush1.msra.mxu0 %v1442
  %1579 = vmatprep.subr.mxu0 0.0
  %1580 = vmatpush1.msra.mxu0 %v1441
  %1581 = vmatprep.subr.mxu0 0.0
  %1582 = vmatpush1.msra.mxu0 %v1440
  %1583 = vmatprep.subr.mxu0 0.0
  %1584 = vmatpush1.msra.mxu0 %v1439
  %1585 = vmatprep.subr.mxu0 0.0
  %1586 = vmatpush1.msra.mxu0 %v1438
  %1587 = vmatprep.subr.mxu0 0.0
  %1588 = vmatpush1.msra.mxu0 %v1437
  %1589 = vmatprep.subr.mxu0 0.0
  %1590 = vmatpush1.msra.mxu0 %v1436
  %1591 = vmatprep.subr.mxu0 0.0
  %1592 = vmatpush1.msra.mxu0 %v1435
  %1593 = vmatprep.subr.mxu0 0.0
  %1594 = vmatpush1.msra.mxu0 %v1434
  %1595 = vmatprep.subr.mxu0 0.0
  %1596 = vmatpush1.msra.mxu0 %v1433
  %1597 = vmatprep.subr.mxu0 0.0
  %1598 = vmatpush1.msra.mxu0 %v1432
  %1599 = vmatprep.subr.mxu0 0.0
  %1600 = vmatpush2.msra.mxu0 0.0
  %1601 = vmatprep.subr.mxu0 0.0
  %1602 = vmatpush2.msra.mxu0 0.0
  %1603 = vmatprep.subr.mxu0 0.0
  %1604 = vmatpush2.msra.mxu0 0.0
  %1605 = vmatprep.subr.mxu0 0.0
  %1606 = vmatpush2.msra.mxu0 0.0
  %1607 = vmatprep.subr.mxu0 0.0
  %1608 = vmatpush2.msra.mxu0 0.0
  %1609 = vmatprep.subr.mxu0 0.0
  %1610 = vmatpush2.msra.mxu0 0.0
  %1611 = vmatprep.subr.mxu0 0.0
  %1612 = vmatpush2.msra.mxu0 0.0
  %1613 = vmatprep.subr.mxu0 0.0
  %1614 = vmatpush2.msra.mxu0 0.0
  %1615 = vmatprep.subr.mxu0 0.0
  %1616 = vmatpush2.msra.mxu0 0.0
  %1617 = vmatprep.subr.mxu0 0.0
  %1618 = vmatpush2.msra.mxu0 0.0
  %1619 = vmatprep.subr.mxu0 0.0
  %1620 = vmatpush2.msra.mxu0 0.0
  %1621 = vmatprep.subr.mxu0 0.0
  %1622 = vmatpush2.msra.mxu0 0.0
  %1623 = vmatprep.subr.mxu0 0.0
  %1624 = vmatpush2.msra.mxu0 0.0
  %1625 = vmatprep.subr.mxu0 0.0
  %1626 = vmatpush2.msra.mxu0 0.0
  %1627 = vmatprep.subr.mxu0 0.0
  %1628 = vmatpush2.msra.mxu0 0.0
  %1629 = vmatprep.subr.mxu0 0.0
  %1630 = vmatpush2.msra.mxu0 0.0
  %1631 = vmatprep.mubr.f32.mxu0 0.0
  %1632 = vmatmul.mubr.f32.gmra.mxu0 %v1467
  %v1633 = vpop.f32.mrf.mxu0
  %v1634 = vadd.f32 %v1549, %v1633
  %v1635 = vpop.f32.mrf.mxu0
  %1636 = vmatprep.mubr.f32.mxu0 0.0
  %1637 = vmatmul.mubr.f32.gmra.mxu0 %v1469
  %v1638 = vpop.f32.mrf.mxu0
  %v1639 = vadd.f32 %v1554, %v1638
  %v1640 = vpop.f32.mrf.mxu0
  %1641 = vmatprep.mubr.f32.mxu0 0.0
  %1642 = vmatmul.mubr.f32.gmra.mxu0 %v1471
  %v1643 = vpop.f32.mrf.mxu0
  %v1644 = vadd.f32 %v1559, %v1643
  %v1645 = vpop.f32.mrf.mxu0
  %1646 = vmatprep.mubr.f32.mxu0 0.0
  %1647 = vmatmul.mubr.f32.gmra.mxu0 %v1477
  %v1648 = vpop.f32.mrf.mxu0
  %v1649 = vadd.f32 %v1564, %v1648
  %v1650 = vpop.f32.mrf.mxu0
  %1651 = vdwg.mxu0
  %v1652 = vmax.f32 %v1634, 0.0
  %v1653 = vmax.f32 %v1639, 0.0
  %v1654 = vmax.f32 %v1644, 0.0
  %v1655 = vmax.f32 %v1649, 0.0
  %v1656 = vmul.f32 %v1652, %v1378
  %v1657 = vmul.f32 %v1653, %v1383
  %v1658 = vmul.f32 %v1654, %v1388
  %v1659 = vmul.f32 %v1655, %v1393
  %s1660 = scalar_lea.vmem [#allocation3], 768
  %v1661 = vld [vmem:[%s1660] sm:$0xff]
  %v1662 = vld [vmem:[%s1660 + $0x8] sm:$0xff]
  %v1663 = vld [vmem:[%s1660 + $0x10] sm:$0xff]
  %v1664 = vld [vmem:[%s1660 + $0x18] sm:$0xff]
  %v1665 = vld [vmem:[%s1660 + $0x20] sm:$0xff]
  %v1666 = vld [vmem:[%s1660 + $0x28] sm:$0xff]
  %v1667 = vld [vmem:[%s1660 + $0x30] sm:$0xff]
  %v1668 = vld [vmem:[%s1660 + $0x38] sm:$0xff]
  %v1669 = vld [vmem:[%s1660 + $0x40] sm:$0xff]
  %v1670 = vld [vmem:[%s1660 + $0x48] sm:$0xff]
  %v1671 = vld [vmem:[%s1660 + $0x50] sm:$0xff]
  %v1672 = vld [vmem:[%s1660 + $0x58] sm:$0xff]
  %v1673 = vld [vmem:[%s1660 + $0x60] sm:$0xff]
  %v1674 = vld [vmem:[%s1660 + $0x68] sm:$0xff]
  %v1675 = vld [vmem:[%s1660 + $0x70] sm:$0xff]
  %v1676 = vld [vmem:[%s1660 + $0x78] sm:$0xff]
  %v1677 = vld [vmem:[%s1660 + $0x80] sm:$0xff]
  %v1678 = vld [vmem:[%s1660 + $0x88] sm:$0xff]
  %v1679 = vld [vmem:[%s1660 + $0x90] sm:$0xff]
  %v1680 = vld [vmem:[%s1660 + $0x98] sm:$0xff]
  %v1681 = vld [vmem:[%s1660 + $0xa0] sm:$0xff]
  %v1682 = vld [vmem:[%s1660 + $0xa8] sm:$0xff]
  %v1683 = vld [vmem:[%s1660 + $0xb0] sm:$0xff]
  %v1684 = vld [vmem:[%s1660 + $0xb8] sm:$0xff]
  %v1685 = vld [vmem:[%s1660 + $0xc0] sm:$0xff]
  %v1686 = vld [vmem:[%s1660 + $0xc8] sm:$0xff]
  %v1687 = vld [vmem:[%s1660 + $0xd0] sm:$0xff]
  %v1688 = vld [vmem:[%s1660 + $0xd8] sm:$0xff]
  %v1689 = vld [vmem:[%s1660 + $0xe0] sm:$0xff]
  %v1690 = vld [vmem:[%s1660 + $0xe8] sm:$0xff]
  %v1691 = vld [vmem:[%s1660 + $0xf0] sm:$0xff]
  %v1692 = vld [vmem:[%s1660 + $0xf8] sm:$0xff]
  %v1693 = vld [vmem:[%s1660 + $0x100] sm:$0xff]
  %v1694 = vld [vmem:[%s1660 + $0x108] sm:$0xff]
  %v1695 = vld [vmem:[%s1660 + $0x110] sm:$0xff]
  %v1696 = vld [vmem:[%s1660 + $0x118] sm:$0xff]
  %v1697 = vld [vmem:[%s1660 + $0x120] sm:$0xff]
  %v1698 = vld [vmem:[%s1660 + $0x128] sm:$0xff]
  %v1699 = vld [vmem:[%s1660 + $0x130] sm:$0xff]
  %v1700 = vld [vmem:[%s1660 + $0x138] sm:$0xff]
  %v1701 = vld [vmem:[%s1660 + $0x140] sm:$0xff]
  %v1702 = vld [vmem:[%s1660 + $0x148] sm:$0xff]
  %v1703 = vld [vmem:[%s1660 + $0x150] sm:$0xff]
  %v1704 = vld [vmem:[%s1660 + $0x158] sm:$0xff]
  %v1705 = vld [vmem:[%s1660 + $0x160] sm:$0xff]
  %v1706 = vld [vmem:[%s1660 + $0x168] sm:$0xff]
  %v1707 = vld [vmem:[%s1660 + $0x170] sm:$0xff]
  %v1708 = vld [vmem:[%s1660 + $0x178] sm:$0xff]
  %v1710 = vrot.slane %v1659, 7
  %v1715 = vrot.slane %v1656, 7
  %v1716 = vrot.slane %v1657, 7
  %v1717 = vsel %vm1171, %v1715, %v1716
  %v1718 = vrot.slane %v1658, 7
  %v1719 = vsel %vm1171, %v1716, %v1718
  %v1720 = vsel %vm1171, %v1718, %v1710
  %v1725 = vsel %vm1171, %v1710, %v1715
  %v1726 = vrot.slane %v1656, 1
  %v1727 = vrot.slane %v1657, 1
  %v1728 = vsel %vm1183, %v1726, %v1727
  %v1729 = vrot.slane %v1658, 1
  %v1730 = vsel %vm1183, %v1727, %v1729
  %v1731 = vrot.slane %v1659, 1
  %v1732 = vsel %vm1183, %v1729, %v1731
  %v1738 = vsel %vm1183, %v1731, %v1726
  %v1739 = vlaneseq
  %v1740 = vshrl.u32 %v1739, 7
  %v1741 = vsub.s32 2, %v1740
  %v1742 = vrot.slane %v1112, %v1741
  %1743 = vmatprep.subr.mxu0 0.0
  %1744 = vmatpush1.msra.mxu0 %v1676
  %1745 = vmatprep.subr.mxu0 0.0
  %1746 = vmatpush1.msra.mxu0 %v1675
  %1747 = vmatprep.subr.mxu0 0.0
  %1748 = vmatpush1.msra.mxu0 %v1674
  %1749 = vmatprep.subr.mxu0 0.0
  %1750 = vmatpush1.msra.mxu0 %v1673
  %1751 = vmatprep.subr.mxu0 0.0
  %1752 = vmatpush1.msra.mxu0 %v1672
  %1753 = vmatprep.subr.mxu0 0.0
  %1754 = vmatpush1.msra.mxu0 %v1671
  %1755 = vmatprep.subr.mxu0 0.0
  %1756 = vmatpush1.msra.mxu0 %v1670
  %1757 = vmatprep.subr.mxu0 0.0
  %1758 = vmatpush1.msra.mxu0 %v1669
  %1759 = vmatprep.subr.mxu0 0.0
  %1760 = vmatpush1.msra.mxu0 %v1668
  %1761 = vmatprep.subr.mxu0 0.0
  %1762 = vmatpush1.msra.mxu0 %v1667
  %1763 = vmatprep.subr.mxu0 0.0
  %1764 = vmatpush1.msra.mxu0 %v1666
  %1765 = vmatprep.subr.mxu0 0.0
  %1766 = vmatpush1.msra.mxu0 %v1665
  %1767 = vmatprep.subr.mxu0 0.0
  %1768 = vmatpush1.msra.mxu0 %v1664
  %1769 = vmatprep.subr.mxu0 0.0
  %1770 = vmatpush1.msra.mxu0 %v1663
  %1771 = vmatprep.subr.mxu0 0.0
  %1772 = vmatpush1.msra.mxu0 %v1662
  %1773 = vmatprep.subr.mxu0 0.0
  %1774 = vmatpush1.msra.mxu0 %v1661
  %1775 = vmatprep.subr.mxu0 0.0
  %1776 = vmatpush2.msra.mxu0 %v1692
  %1777 = vmatprep.subr.mxu0 0.0
  %1778 = vmatpush2.msra.mxu0 %v1691
  %1779 = vmatprep.subr.mxu0 0.0
  %1780 = vmatpush2.msra.mxu0 %v1690
  %1781 = vmatprep.subr.mxu0 0.0
  %1782 = vmatpush2.msra.mxu0 %v1689
  %1783 = vmatprep.subr.mxu0 0.0
  %1784 = vmatpush2.msra.mxu0 %v1688
  %1785 = vmatprep.subr.mxu0 0.0
  %1786 = vmatpush2.msra.mxu0 %v1687
  %1787 = vmatprep.subr.mxu0 0.0
  %1788 = vmatpush2.msra.mxu0 %v1686
  %1789 = vmatprep.subr.mxu0 0.0
  %1790 = vmatpush2.msra.mxu0 %v1685
  %1791 = vmatprep.subr.mxu0 0.0
  %1792 = vmatpush2.msra.mxu0 %v1684
  %1793 = vmatprep.subr.mxu0 0.0
  %1794 = vmatpush2.msra.mxu0 %v1683
  %1795 = vmatprep.subr.mxu0 0.0
  %1796 = vmatpush2.msra.mxu0 %v1682
  %1797 = vmatprep.subr.mxu0 0.0
  %1798 = vmatpush2.msra.mxu0 %v1681
  %1799 = vmatprep.subr.mxu0 0.0
  %1800 = vmatpush2.msra.mxu0 %v1680
  %1801 = vmatprep.subr.mxu0 0.0
  %1802 = vmatpush2.msra.mxu0 %v1679
  %1803 = vmatprep.subr.mxu0 0.0
  %1804 = vmatpush2.msra.mxu0 %v1678
  %1805 = vmatprep.subr.mxu0 0.0
  %1806 = vmatpush2.msra.mxu0 %v1677
  %1807 = vmatprep.mubr.f32.mxu0 %v1656
  %1808 = vmatmul.mubr.f32.gmra.mxu0 %v1725
  %v1809 = vpop.f32.mrf.mxu0
  %v1810 = vadd.f32 %v1742, %v1809
  %v1811 = vpop.f32.mrf.mxu0
  %1812 = vmatprep.mubr.f32.mxu0 %v1657
  %1813 = vmatmul.mubr.f32.gmra.mxu0 %v1717
  %v1814 = vpop.f32.mrf.mxu0
  %v1815 = vadd.f32 %v1742, %v1814
  %v1816 = vpop.f32.mrf.mxu0
  %1817 = vmatprep.mubr.f32.mxu0 %v1658
  %1818 = vmatmul.mubr.f32.gmra.mxu0 %v1719
  %v1819 = vpop.f32.mrf.mxu0
  %v1820 = vadd.f32 %v1742, %v1819
  %v1821 = vpop.f32.mrf.mxu0
  %1822 = vmatprep.mubr.f32.mxu0 %v1659
  %1823 = vmatmul.mubr.f32.gmra.mxu0 %v1720
  %v1824 = vpop.f32.mrf.mxu0
  %v1825 = vadd.f32 %v1742, %v1824
  %v1826 = vpop.f32.mrf.mxu0
  %1827 = vdwg.mxu0
  %1828 = vmatprep.subr.mxu0 0.0
  %1829 = vmatpush1.msra.mxu0 %v1708
  %1830 = vmatprep.subr.mxu0 0.0
  %1831 = vmatpush1.msra.mxu0 %v1707
  %1832 = vmatprep.subr.mxu0 0.0
  %1833 = vmatpush1.msra.mxu0 %v1706
  %1834 = vmatprep.subr.mxu0 0.0
  %1835 = vmatpush1.msra.mxu0 %v1705
  %1836 = vmatprep.subr.mxu0 0.0
  %1837 = vmatpush1.msra.mxu0 %v1704
  %1838 = vmatprep.subr.mxu0 0.0
  %1839 = vmatpush1.msra.mxu0 %v1703
  %1840 = vmatprep.subr.mxu0 0.0
  %1841 = vmatpush1.msra.mxu0 %v1702
  %1842 = vmatprep.subr.mxu0 0.0
  %1843 = vmatpush1.msra.mxu0 %v1701
  %1844 = vmatprep.subr.mxu0 0.0
  %1845 = vmatpush1.msra.mxu0 %v1700
  %1846 = vmatprep.subr.mxu0 0.0
  %1847 = vmatpush1.msra.mxu0 %v1699
  %1848 = vmatprep.subr.mxu0 0.0
  %1849 = vmatpush1.msra.mxu0 %v1698
  %1850 = vmatprep.subr.mxu0 0.0
  %1851 = vmatpush1.msra.mxu0 %v1697
  %1852 = vmatprep.subr.mxu0 0.0
  %1853 = vmatpush1.msra.mxu0 %v1696
  %1854 = vmatprep.subr.mxu0 0.0
  %1855 = vmatpush1.msra.mxu0 %v1695
  %1856 = vmatprep.subr.mxu0 0.0
  %1857 = vmatpush1.msra.mxu0 %v1694
  %1858 = vmatprep.subr.mxu0 0.0
  %1859 = vmatpush1.msra.mxu0 %v1693
  %1860 = vmatprep.subr.mxu0 0.0
  %1861 = vmatpush2.msra.mxu0 0.0
  %1862 = vmatprep.subr.mxu0 0.0
  %1863 = vmatpush2.msra.mxu0 0.0
  %1864 = vmatprep.subr.mxu0 0.0
  %1865 = vmatpush2.msra.mxu0 0.0
  %1866 = vmatprep.subr.mxu0 0.0
  %1867 = vmatpush2.msra.mxu0 0.0
  %1868 = vmatprep.subr.mxu0 0.0
  %1869 = vmatpush2.msra.mxu0 0.0
  %1870 = vmatprep.subr.mxu0 0.0
  %1871 = vmatpush2.msra.mxu0 0.0
  %1872 = vmatprep.subr.mxu0 0.0
  %1873 = vmatpush2.msra.mxu0 0.0
  %1874 = vmatprep.subr.mxu0 0.0
  %1875 = vmatpush2.msra.mxu0 0.0
  %1876 = vmatprep.subr.mxu0 0.0
  %1877 = vmatpush2.msra.mxu0 0.0
  %1878 = vmatprep.subr.mxu0 0.0
  %1879 = vmatpush2.msra.mxu0 0.0
  %1880 = vmatprep.subr.mxu0 0.0
  %1881 = vmatpush2.msra.mxu0 0.0
  %1882 = vmatprep.subr.mxu0 0.0
  %1883 = vmatpush2.msra.mxu0 0.0
  %1884 = vmatprep.subr.mxu0 0.0
  %1885 = vmatpush2.msra.mxu0 0.0
  %1886 = vmatprep.subr.mxu0 0.0
  %1887 = vmatpush2.msra.mxu0 0.0
  %1888 = vmatprep.subr.mxu0 0.0
  %1889 = vmatpush2.msra.mxu0 0.0
  %1890 = vmatprep.subr.mxu0 0.0
  %1891 = vmatpush2.msra.mxu0 0.0
  %1892 = vmatprep.mubr.f32.mxu0 0.0
  %1893 = vmatmul.mubr.f32.gmra.mxu0 %v1728
  %v1894 = vpop.f32.mrf.mxu0
  %v1895 = vadd.f32 %v1810, %v1894
  %v1896 = vpop.f32.mrf.mxu0
  %1897 = vmatprep.mubr.f32.mxu0 0.0
  %1898 = vmatmul.mubr.f32.gmra.mxu0 %v1730
  %v1899 = vpop.f32.mrf.mxu0
  %v1900 = vadd.f32 %v1815, %v1899
  %v1901 = vpop.f32.mrf.mxu0
  %1902 = vmatprep.mubr.f32.mxu0 0.0
  %1903 = vmatmul.mubr.f32.gmra.mxu0 %v1732
  %v1904 = vpop.f32.mrf.mxu0
  %v1905 = vadd.f32 %v1820, %v1904
  %v1906 = vpop.f32.mrf.mxu0
  %1907 = vmatprep.mubr.f32.mxu0 0.0
  %1908 = vmatmul.mubr.f32.gmra.mxu0 %v1738
  %v1909 = vpop.f32.mrf.mxu0
  %v1910 = vadd.f32 %v1825, %v1909
  %v1911 = vpop.f32.mrf.mxu0
  %1912 = vdwg.mxu0
  %v1913 = vmax.f32 %v1895, 0.0
  %v1914 = vmax.f32 %v1900, 0.0
  %v1915 = vmax.f32 %v1905, 0.0
  %v1916 = vmax.f32 %v1910, 0.0
  %v1917 = vld [vmem:[%s6] sm:$0xff]
  %v1918 = vld [vmem:[%s6 + $0x8] sm:$0xff]
  %v1919 = vld [vmem:[%s6 + $0x10] sm:$0xff]
  %v1920 = vld [vmem:[%s6 + $0x18] sm:$0xff]
  %v1921 = vld [vmem:[%s7] sm:$0xff]
  %v1922 = vld [vmem:[%s7 + $0x8] sm:$0xff]
  %v1923 = vld [vmem:[%s7 + $0x10] sm:$0xff]
  %v1924 = vld [vmem:[%s7 + $0x18] sm:$0xff]
  %1926 = vset.pattern.permute.xlu0 0
  %1927 = vperm.xlu0 %1926, %v1921
  %v1928 = vpop.permute.xlu0 %1927
  %1931 = vset.pattern.permute.xlu0 0
  %1932 = vperm.xlu0 %1931, %v1922
  %v1933 = vpop.permute.xlu0 %1932
  %1936 = vset.pattern.permute.xlu0 0
  %1937 = vperm.xlu0 %1936, %v1923
  %v1938 = vpop.permute.xlu0 %1937
  %1941 = vset.pattern.permute.xlu0 0
  %1942 = vperm.xlu0 %1941, %v1924
  %v1943 = vpop.permute.xlu0 %1942
  %vm1945 = vcmask 261120
  %v1947 = vsel %vm1945, %v1917, 0
  %v1950 = vsel %vm1945, %v1918, 0
  %v1953 = vsel %vm1945, %v1919, 0
  %v1956 = vsel %vm1945, %v1920, 0
  %1958 = vmatprep.subr.mxu0 0.0
  %1959 = vmatpush1.msra.mxu0 0.0
  %1960 = vmatprep.subr.mxu0 0.0
  %1961 = vmatpush1.msra.mxu0 0.0
  %1962 = vmatprep.subr.mxu0 0.0
  %1963 = vmatpush1.msra.mxu0 0.0
  %1964 = vmatprep.subr.mxu0 0.0
  %1965 = vmatpush1.msra.mxu0 0.0
  %1966 = vmatprep.subr.mxu0 0.0
  %1967 = vmatpush1.msra.mxu0 0.0
  %1968 = vmatprep.subr.mxu0 0.0
  %1969 = vmatpush1.msra.mxu0 0.0
  %1970 = vmatprep.subr.mxu0 0.0
  %1971 = vmatpush1.msra.mxu0 0.0
  %1972 = vmatprep.subr.mxu0 0.0
  %1973 = vmatpush1.msra.mxu0 0.0
  %1974 = vmatprep.subr.mxu0 0.0
  %1975 = vmatpush1.msra.mxu0 0.0
  %1976 = vmatprep.subr.mxu0 0.0
  %1977 = vmatpush1.msra.mxu0 0.0
  %1978 = vmatprep.subr.mxu0 0.0
  %1979 = vmatpush1.msra.mxu0 0.0
  %1980 = vmatprep.subr.mxu0 0.0
  %1981 = vmatpush1.msra.mxu0 0.0
  %1982 = vmatprep.subr.mxu0 0.0
  %1983 = vmatpush1.msra.mxu0 %v1916
  %1984 = vmatprep.subr.mxu0 0.0
  %1985 = vmatpush1.msra.mxu0 %v1915
  %1986 = vmatprep.subr.mxu0 0.0
  %1987 = vmatpush1.msra.mxu0 %v1914
  %1988 = vmatprep.subr.mxu0 0.0
  %1989 = vmatpush1.msra.mxu0 %v1913
  %1990 = vmatprep.subr.mxu0 0.0
  %1991 = vmatpush2.msra.mxu0 0.0
  %1992 = vmatprep.subr.mxu0 0.0
  %1993 = vmatpush2.msra.mxu0 0.0
  %1994 = vmatprep.subr.mxu0 0.0
  %1995 = vmatpush2.msra.mxu0 0.0
  %1996 = vmatprep.subr.mxu0 0.0
  %1997 = vmatpush2.msra.mxu0 0.0
  %1998 = vmatprep.subr.mxu0 0.0
  %1999 = vmatpush2.msra.mxu0 0.0
  %2000 = vmatprep.subr.mxu0 0.0
  %2001 = vmatpush2.msra.mxu0 0.0
  %2002 = vmatprep.subr.mxu0 0.0
  %2003 = vmatpush2.msra.mxu0 0.0
  %2004 = vmatprep.subr.mxu0 0.0
  %2005 = vmatpush2.msra.mxu0 0.0
  %2006 = vmatprep.subr.mxu0 0.0
  %2007 = vmatpush2.msra.mxu0 0.0
  %2008 = vmatprep.subr.mxu0 0.0
  %2009 = vmatpush2.msra.mxu0 0.0
  %2010 = vmatprep.subr.mxu0 0.0
  %2011 = vmatpush2.msra.mxu0 0.0
  %2012 = vmatprep.subr.mxu0 0.0
  %2013 = vmatpush2.msra.mxu0 0.0
  %2014 = vmatprep.subr.mxu0 0.0
  %2015 = vmatpush2.msra.mxu0 0.0
  %2016 = vmatprep.subr.mxu0 0.0
  %2017 = vmatpush2.msra.mxu0 0.0
  %2018 = vmatprep.subr.mxu0 0.0
  %2019 = vmatpush2.msra.mxu0 0.0
  %2020 = vmatprep.subr.mxu0 0.0
  %2021 = vmatpush2.msra.mxu0 0.0
  %2022 = vmatprep.mubr.f32.mxu0 0.0
  %2023 = vmatmul.mubr.f32.gmra.mxu0 %v1947
  %v2024 = vpop.f32.mrf.mxu0
  %v2025 = vadd.f32 %v1928, %v2024
  %v2026 = vpop.f32.mrf.mxu0
  %2027 = vmatprep.mubr.f32.mxu0 0.0
  %2028 = vmatmul.mubr.f32.gmra.mxu0 %v1950
  %v2029 = vpop.f32.mrf.mxu0
  %v2030 = vadd.f32 %v1933, %v2029
  %v2031 = vpop.f32.mrf.mxu0
  %2032 = vmatprep.mubr.f32.mxu0 0.0
  %2033 = vmatmul.mubr.f32.gmra.mxu0 %v1953
  %v2034 = vpop.f32.mrf.mxu0
  %v2035 = vadd.f32 %v1938, %v2034
  %v2036 = vpop.f32.mrf.mxu0
  %2037 = vmatprep.mubr.f32.mxu0 0.0
  %2038 = vmatmul.mubr.f32.gmra.mxu0 %v1956
  %v2039 = vpop.f32.mrf.mxu0
  %v2040 = vadd.f32 %v1943, %v2039
  %v2041 = vpop.f32.mrf.mxu0
  %2042 = vdwg.mxu0
  %2043 = vst [vmem:[%s9] sm:$0xff] %v2025
  %2044 = vst [vmem:[%s9 + $0x8] sm:$0xff] %v2030
  %2045 = vst [vmem:[%s9 + $0x10] sm:$0xff] %v2035
  %2046 = vst [vmem:[%s9 + $0x18] sm:$0xff] %v2040
  // Predicated region
  $region68: #{dpm_forward.1} parent=0 // pred_check
    _
  $region69: #{dpm_forward.1} parent=0 // pred_check_branch
    %2048 = sbr.rel (0) target = $region71
  $region70: #{dpm_forward.1} parent=0 // pred_region
    _
  $region71: #{dpm_forward.1} parent=0 // pred_fallthru
    _
  // Predicated region
  $region72: #{dpm_forward.1} parent=0 // pred_check
    _
  $region73: #{dpm_forward.1} parent=0 // pred_check_branch
    %2050 = sbr.rel (0) target = $region75
  $region74: #{dpm_forward.1} parent=0 // pred_region
    _
  $region75: #{dpm_forward.1} parent=0 // pred_fallthru
    _
  %2051 = vsyncmov [#allocation4]
  %s2052 = vpop.sfrf %2051
  %p2053 = scmp.eq.s32.totalorder %s2052, 0
  %p2054 = pneg %p2053
  %2056 = shalt.err (%p2054)

</llo_original>
